<compile_context>
chip_gen: v6e
topology: v6e:2x2x1
jax: 0.10.0
libtpu: 0.0.40
codegen_flags: <defaults>
</compile_context>

<pallas_src>
import jax
import jax.numpy as jnp
from jax.experimental import pallas as pl
from jax.experimental.pallas import tpu as pltpu

_LANE = 128
_BASE_SUBLANE = 8
_MIN_SPLIT_BYTES = 2 * 1024 * 1024   # arrays bigger than this always get >= 2 blocks
_SMALL_ELEMS = 256 * 1024            # below ~1 MiB (f32) a fused XLA affine already wins


def _affine_kernel(w_ref, b_ref, x_ref, o_ref):
    # w_ref / b_ref: (1,) f32 scalars in SMEM; x_ref / o_ref: VMEM tiles.
    # Explicit cast keeps mixed-dtype inputs (e.g. bf16 x, f32 params) lowering cleanly.
    o_ref[...] = (w_ref[0] * x_ref[...] + b_ref[0]).astype(o_ref.dtype)


def _target_block_bytes() -> int:
    """Generation-aware block budget for the streaming pipeline."""
    try:
        kind = jax.devices()[0].device_kind.lower()
    except Exception:
        kind = ""
    # v7x (~3.2 TB/s per-TC HBM): at 4 MiB the ~0.35 us/step overhead costs ~12% of
    # roofline -> use 8 MiB (4x double-buffered = 32 MiB, fits its 64 MiB VMEM).
    # v6e (128 MiB VMEM): 8 MiB is a small free win. v5e / unknown: 4 MiB is plenty.
    if "7" in kind or "v6" in kind:
        return 8 * 1024 * 1024
    return 4 * 1024 * 1024


def _lane_dense_2d(x):
    """Return a 2-D view of x whose last dim is a multiple of 128, or None."""
    n = x.size
    if x.ndim >= 2 and x.shape[-1] % _LANE == 0:
        return x.reshape(-1, x.shape[-1])
    for lane_w in (4096, 2048, 1024, 512, 256, _LANE):
        if n % lane_w == 0:
            return x.reshape(n // lane_w, lane_w)
    return None


def _pick_tiles(rows, cols, itemsize, target_bytes):
    """Pick (tile_r, tile_c): ~target_bytes per block, dtype-aware sublane rounding,
    and >=2 blocks whenever the whole array exceeds _MIN_SPLIT_BYTES (both v7x TCs)."""
    sub = max(_BASE_SUBLANE, 32 // itemsize)      # 8 for f32, 16 for bf16, 32 for int8/fp8
    total_bytes = rows * cols * itemsize
    budget = target_bytes
    if total_bytes > _MIN_SPLIT_BYTES:
        budget = min(budget, max(_MIN_SPLIT_BYTES // 2, total_bytes // 2))
    # Only split columns if a single `sub`-row stripe already blows the budget.
    if sub * cols * itemsize > budget:
        tile_c = max(_LANE, min(cols, (budget // (sub * itemsize)) // _LANE * _LANE))
    else:
        tile_c = cols
    tile_r = budget // (tile_c * itemsize)
    tile_r = max(sub, (tile_r // sub) * sub)
    tile_r = min(tile_r, rows)
    if tile_r < rows and tile_r % sub:            # keep packed-dtype tiles unmasked
        tile_r = max(sub, (tile_r // sub) * sub)
    return tile_r, tile_c


def linear_regression_forward(x: jnp.ndarray, weight: jnp.ndarray,
                              bias: jnp.ndarray) -> jnp.ndarray:
    """y = weight * x + bias, with weight/bias shape-(1,) params (like nn.Parameter)."""
    orig_shape = x.shape
    weight = weight.astype(jnp.float32).reshape((1,))
    bias = bias.astype(jnp.float32).reshape((1,))

    # Small inputs: a single sub-block grid step can't amortize launch overhead, and XLA
    # can fuse the affine into neighbors.
    if x.size < _SMALL_ELEMS:
        return (weight * x + bias).astype(x.dtype).reshape(orig_shape)

    x2d = _lane_dense_2d(x)
    if x2d is None:
        # TODO(synk): pad-to-lane path for sizes with no 128-divisible factorization.
        return (weight * x + bias).astype(x.dtype).reshape(orig_shape)

    rows, cols = x2d.shape
    itemsize = x2d.dtype.itemsize
    tile_r, tile_c = _pick_tiles(rows, cols, itemsize, _target_block_bytes())
    block_bytes = tile_r * tile_c * itemsize
    # Scoped VMEM derived from the real footprint: double-buffered in + out, plus headroom.
    vmem_limit = int(max(32 * 1024 * 1024, 4 * block_bytes + 8 * 1024 * 1024))

    if tile_c == cols:
        # Common case: collapse the column axis -> 1-D parallel grid over rows.
        grid = (pl.cdiv(rows, tile_r),)
        x_spec = pl.BlockSpec((tile_r, tile_c), lambda i: (i, 0))
        o_spec = pl.BlockSpec((tile_r, tile_c), lambda i: (i, 0))
        dims = ("parallel",)
    else:
        grid = (pl.cdiv(rows, tile_r), pl.cdiv(cols, tile_c))
        x_spec = pl.BlockSpec((tile_r, tile_c), lambda i, j: (i, j))
        o_spec = pl.BlockSpec((tile_r, tile_c), lambda i, j: (i, j))
        dims = ("parallel", "parallel")

    y2d = pl.pallas_call(
        _affine_kernel,
        out_shape=jax.ShapeDtypeStruct(x2d.shape, x2d.dtype),
        grid=grid,
        in_specs=[
            pl.BlockSpec(memory_space=pltpu.MemorySpace.SMEM),   # weight (1,)
            pl.BlockSpec(memory_space=pltpu.MemorySpace.SMEM),   # bias   (1,)
            x_spec,
        ],
        out_specs=o_spec,
        compiler_params=pltpu.CompilerParams(
            dimension_semantics=dims,
            vmem_limit_bytes=vmem_limit,
        ),
    )(weight, bias, x2d)
    return y2d.reshape(orig_shape)


if __name__ == "__main__":
    key = jax.random.PRNGKey(0)
    k_w, k_b, k_x1, k_x2, k_x3 = jax.random.split(key, 5)

    # Parameters matching nn.Parameter(torch.randn(1)) shapes.
    weight = jax.random.normal(k_w, (1,), dtype=jnp.float32)
    bias = jax.random.normal(k_b, (1,), dtype=jnp.float32)

    # Small input consistent with the module (elementwise, any shape): XLA fallback path.
    x_small = jax.random.normal(k_x1, (2, 4, 16, 16), dtype=jnp.float32)
    y_small = jax.block_until_ready(linear_regression_forward(x_small, weight, bias))
    assert y_small.shape == x_small.shape and y_small.dtype == x_small.dtype
    assert jnp.allclose(y_small, weight * x_small + bias, rtol=1e-6, atol=1e-6)

    # Larger input: exercises the Pallas streaming path with >= 2 parallel grid blocks.
    x_big = jax.random.normal(k_x2, (2048, 512), dtype=jnp.float32)
    y_big = jax.block_until_ready(linear_regression_forward(x_big, weight, bias))
    assert y_big.shape == x_big.shape and y_big.dtype == x_big.dtype
    assert jnp.allclose(y_big, weight * x_big + bias, rtol=1e-6, atol=1e-6)

    # bf16 input: exercises the explicit output cast and dtype-aware sublane rounding.
    x_bf16 = jax.random.normal(k_x3, (1024, 1024), dtype=jnp.float32).astype(jnp.bfloat16)
    y_bf16 = jax.block_until_ready(linear_regression_forward(x_bf16, weight, bias))
    ref_bf16 = (weight * x_bf16 + bias).astype(jnp.bfloat16)
    assert y_bf16.dtype == jnp.bfloat16 and y_bf16.shape == x_bf16.shape
    assert jnp.allclose(y_bf16.astype(jnp.float32), ref_bf16.astype(jnp.float32),
                        rtol=2e-2, atol=2e-2)

    print("KERNEL_OK")
</pallas_src>

<mosaic_0001>
module attributes {stable_mosaic.version = 11 : i64} {
  func.func @_affine_kernel(%arg0: i32, %arg1: memref<1xf32, #tpu.memory_space<smem>>, %arg2: memref<1xf32, #tpu.memory_space<smem>>, %arg3: memref<1024x512xf32, #tpu.memory_space<vmem>>, %arg4: memref<1024x512xf32, #tpu.memory_space<vmem>>) attributes {dimension_semantics = [#tpu.dimension_semantics<parallel>], iteration_bounds = array<i64: 2>, scalar_prefetch = 0 : i64, scratch_operands = 0 : i64, tpu.core_type = #tpu.core_type<tc>, window_params = [{transform_indices = @transform_0, window_bounds = array<i64: 1>}, {transform_indices = @transform_1, window_bounds = array<i64: 1>}, {transform_indices = @transform_2, window_bounds = array<i64: 1024, 512>}, {transform_indices = @transform_3, window_bounds = array<i64: 1024, 512>}]} {
    %c0 = arith.constant 0 : index
    %0 = memref.load %arg1[%c0] : memref<1xf32, #tpu.memory_space<smem>>
    %c0_0 = arith.constant 0 : index
    %c0_1 = arith.constant 0 : index
    %1 = vector.load %arg3[%c0_0, %c0_1] : memref<1024x512xf32, #tpu.memory_space<vmem>>, vector<1024x512xf32>
    %2 = vector.broadcast %0 : f32 to vector<1024x512xf32>
    %3 = arith.mulf %2, %1 : vector<1024x512xf32>
    %c0_2 = arith.constant 0 : index
    %4 = memref.load %arg2[%c0_2] : memref<1xf32, #tpu.memory_space<smem>>
    %5 = vector.broadcast %4 : f32 to vector<1024x512xf32>
    %6 = arith.addf %3, %5 : vector<1024x512xf32>
    %c0_3 = arith.constant 0 : index
    %c0_4 = arith.constant 0 : index
    %7 = vector.load %arg4[%c0_3, %c0_4] : memref<1024x512xf32, #tpu.memory_space<vmem>>, vector<1024x512xf32>
    tpu.vector_store %arg4[%c0_3, %c0_4], %6 {strides = array<i32>} : memref<1024x512xf32, #tpu.memory_space<vmem>>, vector<1024x512xf32>,
    return
  }
  func.func @transform_0(%arg0: i32) -> i32 {
    %c0_i32 = arith.constant 0 : i32
    %c0_i32_0 = arith.constant 0 : i32
    return %c0_i32 : i32
  }
  func.func @transform_1(%arg0: i32) -> i32 {
    %c0_i32 = arith.constant 0 : i32
    %c0_i32_0 = arith.constant 0 : i32
    return %c0_i32 : i32
  }
  func.func @transform_2(%arg0: i32) -> (i32, i32) {
    %c0_i32 = arith.constant 0 : i32
    %c0_i32_0 = arith.constant 0 : i32
    return %arg0, %c0_i32 : i32, i32
  }
  func.func @transform_3(%arg0: i32) -> (i32, i32) {
    %c0_i32 = arith.constant 0 : i32
    %c0_i32_0 = arith.constant 0 : i32
    return %arg0, %c0_i32 : i32, i32
  }
}

</mosaic_0001>

<llo_original>
// kernel: tpu_custom_call.1
$region0: #{tpu_custom_call.1}
  #allocation0 [shape = 'u32[]', space=smem, size = 0x4, offset = 0x4, fixed_abs, tag = 'smem constant byte address 0x4 - core index']
  #allocation1 [shape = 'u32[144,128]{1,0:T(1,128)}', space=vmem, size = 0x12000, scoped, tag = 'internal scratch']
  #allocation2 [shape = 'f32[1]{0:T(128)S(6)}', space=smem, size = 0x200, scoped, tag = 'scoped memory for tpu_custom_call.1']
  #allocation3 [shape = 'f32[1]{0:T(128)S(6)}', space=smem, size = 0x200, scoped, tag = 'scoped memory for tpu_custom_call.1']
  %s0 = inlined_call_operand.<no memory space> [shape: f32[1], index: 0, kind: input, shape index: {}]
  %s1 = inlined_call_operand.<no memory space> [shape: f32[1], index: 1, kind: input, shape index: {}]
  %s2 = inlined_call_operand.hbm [shape: f32[2048,512], index: 2, kind: input, shape index: {}]
  %s3 = inlined_call_operand.hbm [shape: f32[2048,512], index: 3, kind: output, shape index: {}]
  %s4 = sld [smem:[#allocation0]]
  $region49: #{tpu_custom_call.1} parent=0
    _
  %s6 = ssub.s32 1, %s4
  %s7 = scalar_select 0, %s6, %s4
  %8 = sst [smem:[#allocation2]] %s0
  %9 = sst [smem:[#allocation3]] %s1
  $region1: #{tpu_custom_call.1} parent=0
    #allocation4 [shape = 'u8[4194304]{0}', space=vmem, size = 0x400000, scoped, tag = 'input window, operand 2']
    #allocation5 [shape = 's32[2]{0}', space=sflag, size = 0x8, scoped, tag = 'scoped memory for tpu_custom_call.1']
    #allocation6 [shape = 's32[2]{0}', space=sflag, size = 0x8, scoped, tag = 'scoped memory for tpu_custom_call.1']
    #allocation7 [shape = 'u8[4194304]{0}', space=vmem, size = 0x400000, scoped, tag = 'output window, operand 0']
    %10 = vsyncpa [#allocation5], 0
    %s11 = scalar_lea.sflag [#allocation5], 1
    %12 = vsyncpa %s11, 0
    %13 = vsyncpa [#allocation6], 0
    %s14 = scalar_lea.sflag [#allocation6], 1
    %15 = vsyncpa %s14, 0
    loop: start=0, step=1, limit=4
    $region2: #{tpu_custom_call.1} parent=1 // loop_pre_header
      _
    $region3: #{tpu_custom_call.1} parent=1 // loop_header
      %s17 = sphi 0, %s21
      %p18 = scmp.ge.s32.totalorder %s17, 4
      %s25 = sphi 0, %s25
      %s27 = sphi 0, %s25
      %s28 = sphi 0, %s27
      %s42 = sphi 0, %s28
      %s46 = sphi 0, %s46
      %s48 = sphi 0, %s46
      %s49 = sphi 0, %s48
      %s63 = sphi 0, %s49
      %s69 = sphi 0, %s71
      %s72 = sphi 0, %s69
      %s73 = sphi 0, %s72
      %s89 = sphi 0, %s73
      %s95 = sphi 0, %s97
      %s98 = sphi 0, %s95
      %s99 = sphi 0, %s98
      %s115 = sphi 0, %s99
    $region4: #{tpu_custom_call.1} parent=1 // loop_header_branch
      %20 = sbr.rel (%p18) target = $region8
    $region5: #{tpu_custom_call.1} parent=1 // loop_body
      %s22 = ssub.s32 %s17, 1
      %s23 = ssub.s32 %s17, 2
      %s24 = sadd.s32 %s17, 1
      %s26 = sadd.s32 %s25, 1
      %p29 = scmp.eq.s32.totalorder %s17, 1
      %p30 = scmp.ne.s32.totalorder %s25, %s27
      %p31 = scmp.eq.s32.totalorder %s17, 0
      %p32 = por %p30, %p31
      %p33 = scmp.ne.s32.totalorder %s25, %s27
      %p34 = scmp.eq.s32.totalorder %s22, 1
      %p35 = por %p33, %p34
      %p36 = scmp.ne.s32.totalorder %s27, %s28
      %p37 = scmp.eq.s32.totalorder %s22, 0
      %p38 = por %p36, %p37
      %p39 = scmp.ne.s32.totalorder %s27, %s28
      %p40 = scmp.eq.s32.totalorder %s23, 1
      %p41 = por %p39, %p40
      %p43 = scmp.ne.s32.totalorder %s28, %s42
      %p44 = scmp.eq.s32.totalorder %s23, 0
      %p45 = por %p43, %p44
      %s47 = sadd.s32 %s46, 1
      %p50 = scmp.eq.s32.totalorder %s17, 1
      %p51 = scmp.ne.s32.totalorder %s46, %s48
      %p52 = scmp.eq.s32.totalorder %s17, 0
      %p53 = por %p51, %p52
      %p54 = scmp.ne.s32.totalorder %s46, %s48
      %p55 = scmp.eq.s32.totalorder %s22, 1
      %p56 = por %p54, %p55
      %p57 = scmp.ne.s32.totalorder %s48, %s49
      %p58 = scmp.eq.s32.totalorder %s22, 0
      %p59 = por %p57, %p58
      %p60 = scmp.ne.s32.totalorder %s48, %s49
      %p61 = scmp.eq.s32.totalorder %s23, 1
      %p62 = por %p60, %p61
      %p64 = scmp.ne.s32.totalorder %s49, %s63
      %p65 = scmp.eq.s32.totalorder %s23, 0
      %p66 = por %p64, %p65
      %s67 = ssub.s32 %s17, %s24
      %p68 = scmp.eq.s32.totalorder %s67, 0
      %s70 = sadd.s32 %s69, 1
      %s71 = scalar_select %p68, %s69, %s70
      %p74 = pneg %p68
      %p75 = scmp.eq.s32.totalorder %s17, 1
      %p76 = por %p74, %p75
      %p77 = scmp.ne.s32.totalorder %s69, %s72
      %p78 = scmp.eq.s32.totalorder %s17, 0
      %p79 = por %p77, %p78
      %p80 = scmp.ne.s32.totalorder %s69, %s72
      %p81 = scmp.eq.s32.totalorder %s22, 1
      %p82 = por %p80, %p81
      %p83 = scmp.ne.s32.totalorder %s72, %s73
      %p84 = scmp.eq.s32.totalorder %s22, 0
      %p85 = por %p83, %p84
      %p86 = scmp.ne.s32.totalorder %s72, %s73
      %p87 = scmp.eq.s32.totalorder %s23, 1
      %p88 = por %p86, %p87
      %p90 = scmp.ne.s32.totalorder %s73, %s89
      %p91 = scmp.eq.s32.totalorder %s23, 0
      %p92 = por %p90, %p91
      %s93 = ssub.s32 %s17, %s24
      %p94 = scmp.eq.s32.totalorder %s93, 0
      %s96 = sadd.s32 %s95, 1
      %s97 = scalar_select %p94, %s95, %s96
      %p100 = pneg %p94
      %p101 = scmp.eq.s32.totalorder %s17, 1
      %p102 = por %p100, %p101
      %p103 = scmp.ne.s32.totalorder %s95, %s98
      %p104 = scmp.eq.s32.totalorder %s17, 0
      %p105 = por %p103, %p104
      %p106 = scmp.ne.s32.totalorder %s95, %s98
      %p107 = scmp.eq.s32.totalorder %s22, 1
      %p108 = por %p106, %p107
      %p109 = scmp.ne.s32.totalorder %s98, %s99
      %p110 = scmp.eq.s32.totalorder %s22, 0
      %p111 = por %p109, %p110
      %p112 = scmp.ne.s32.totalorder %s98, %s99
      %p113 = scmp.eq.s32.totalorder %s23, 1
      %p114 = por %p112, %p113
      %p116 = scmp.ne.s32.totalorder %s99, %s115
      %p117 = scmp.eq.s32.totalorder %s23, 0
      %p118 = por %p116, %p117
      %p119 = scmp.le.s32.totalorder 1, %s17
      %p120 = scmp.lt.s32.totalorder %s17, 3
      %p121 = pnand %p119, %p120
      %p122 = pneg %p121
      // Predicated region
      $region9: #{tpu_custom_call.1} parent=5 // pred_check
        _
      $region10: #{tpu_custom_call.1} parent=5 // pred_check_branch
        %124 = sbr.rel (%p121) target = $region12
      $region11: #{tpu_custom_call.1} parent=5 // pred_region
        %s125 = ssub.s32 %s17, 1
        // Predicated region
        $region13: #{tpu_custom_call.1} parent=11 // pred_check
          %p126 = pneg %p38
        $region14: #{tpu_custom_call.1} parent=11 // pred_check_branch
          %128 = sbr.rel (%p126) target = $region16
        $region15: #{tpu_custom_call.1} parent=11 // pred_region
          _
        $region16: #{tpu_custom_call.1} parent=11 // pred_fallthru
          _
        // Predicated region
        $region17: #{tpu_custom_call.1} parent=11 // pred_check
          %p129 = pneg %p59
        $region18: #{tpu_custom_call.1} parent=11 // pred_check_branch
          %131 = sbr.rel (%p129) target = $region20
        $region19: #{tpu_custom_call.1} parent=11 // pred_region
          _
        $region20: #{tpu_custom_call.1} parent=11 // pred_fallthru
          _
      $region12: #{tpu_custom_call.1} parent=5 // pred_fallthru
        _
      %p132 = scmp.lt.s32.totalorder %s17, 2
      // Predicated region
      $region21: #{tpu_custom_call.1} parent=5 // pred_check
        %p133 = pneg %p132
      $region22: #{tpu_custom_call.1} parent=5 // pred_check_branch
        %135 = sbr.rel (%p133) target = $region24
      $region23: #{tpu_custom_call.1} parent=5 // pred_region
        // Predicated region
        $region25: #{tpu_custom_call.1} parent=23 // pred_check
          %p136 = pneg %p79
        $region26: #{tpu_custom_call.1} parent=23 // pred_check_branch
          %138 = sbr.rel (%p136) target = $region28
        $region27: #{tpu_custom_call.1} parent=23 // pred_region
          %s139 = sand.u32 %s69, 1
          %s140 = scalar_lea.sflag [#allocation5], %s139
          %s141 = sand.u32 %s69, 1
          %s142 = smul.addr %s141, 4096
          %s143 = scalar_lea.vmem [#allocation4], %s142
          %s144 = smul.u32 128, %s17
          %s146 = ssub.s32 65536, 65536
          %147 = vsyncadd %s140, %s146
          %s148 = smul.addr %s144, 4
          %s149 = smul.addr %s148, 128
          %s150 = scalar_lea.hbm %s2, %s149
          %s151 = sshll.u32 %s143, 4
          %s152 = int_to_ptr.vmem [resolvable:$true] %s151
          %157 = dma.hbm_to_vmem [thread:$0]  %s150, 65536, %s152, %s140, 512, 512, 32
        $region28: #{tpu_custom_call.1} parent=23 // pred_fallthru
          _
      $region24: #{tpu_custom_call.1} parent=5 // pred_fallthru
        _
      %p158 = scmp.le.s32.totalorder 1, %s17
      %p159 = scmp.lt.s32.totalorder %s17, 3
      %p160 = pnand %p158, %p159
      %p161 = pneg %p160
      // Predicated region
      $region29: #{tpu_custom_call.1} parent=5 // pred_check
        _
      $region30: #{tpu_custom_call.1} parent=5 // pred_check_branch
        %163 = sbr.rel (%p160) target = $region32
      $region31: #{tpu_custom_call.1} parent=5 // pred_region
        %s164 = ssub.s32 %s17, 1
        %s165 = sand.u32 %s72, 1
        %s166 = scalar_lea.sflag [#allocation5], %s165
        %s167 = sand.u32 %s72, 1
        %s168 = smul.addr %s167, 4096
        %s169 = scalar_lea.vmem [#allocation4], %s168
        // Predicated region
        $region33: #{tpu_custom_call.1} parent=31 // pred_check
          %p170 = pneg %p85
        $region34: #{tpu_custom_call.1} parent=31 // pred_check_branch
          %172 = sbr.rel (%p170) target = $region36
        $region35: #{tpu_custom_call.1} parent=31 // pred_region
          %173 = dma.done %s166, 65536
        $region36: #{tpu_custom_call.1} parent=31 // pred_fallthru
          _
        %p174 = pneg %p38
        %p175 = pneg %p35
        %p176 = pneg %p59
        %p177 = pneg %p56
        %s178 = sand.u32 %s72, 1
        %s179 = scalar_lea.sflag [#allocation5], %s178
        %s180 = sand.u32 %s72, 1
        %s181 = smul.addr %s180, 4096
        %s182 = scalar_lea.vmem [#allocation4], %s181
        %p183 = pneg %p85
        %p184 = pneg %p82
        %p185 = pneg %p111
        %p186 = pneg %p108
        %s187 = sand.u32 %s98, 1
        %s188 = scalar_lea.sflag [#allocation6], %s187
        %s189 = sand.u32 %s98, 1
        %s190 = smul.addr %s189, 4096
        %s191 = scalar_lea.vmem [#allocation7], %s190
        %s192 = smul.u32 128, %s22
        %s193 = smul.u32 128, %s22
        %s194 = sld [smem:[#allocation2]]
        %v195 = vld [vmem:[%s169] sm:$0xff]
        %v196 = vld [vmem:[%s169 + $0x8] sm:$0xff]
        %v197 = vld [vmem:[%s169 + $0x10] sm:$0xff]
        %v198 = vld [vmem:[%s169 + $0x18] sm:$0xff]
        %v199 = vld [vmem:[%s169 + $0x20] sm:$0xff]
        %v200 = vld [vmem:[%s169 + $0x28] sm:$0xff]
        %v201 = vld [vmem:[%s169 + $0x30] sm:$0xff]
        %v202 = vld [vmem:[%s169 + $0x38] sm:$0xff]
        %v203 = vld [vmem:[%s169 + $0x40] sm:$0xff]
        %v204 = vld [vmem:[%s169 + $0x48] sm:$0xff]
        %v205 = vld [vmem:[%s169 + $0x50] sm:$0xff]
        %v206 = vld [vmem:[%s169 + $0x58] sm:$0xff]
        %v207 = vld [vmem:[%s169 + $0x60] sm:$0xff]
        %v208 = vld [vmem:[%s169 + $0x68] sm:$0xff]
        %v209 = vld [vmem:[%s169 + $0x70] sm:$0xff]
        %v210 = vld [vmem:[%s169 + $0x78] sm:$0xff]
        %v211 = vld [vmem:[%s169 + $0x80] sm:$0xff]
        %v212 = vld [vmem:[%s169 + $0x88] sm:$0xff]
        %v213 = vld [vmem:[%s169 + $0x90] sm:$0xff]
        %v214 = vld [vmem:[%s169 + $0x98] sm:$0xff]
        %v215 = vld [vmem:[%s169 + $0xa0] sm:$0xff]
        %v216 = vld [vmem:[%s169 + $0xa8] sm:$0xff]
        %v217 = vld [vmem:[%s169 + $0xb0] sm:$0xff]
        %v218 = vld [vmem:[%s169 + $0xb8] sm:$0xff]
        %v219 = vld [vmem:[%s169 + $0xc0] sm:$0xff]
        %v220 = vld [vmem:[%s169 + $0xc8] sm:$0xff]
        %v221 = vld [vmem:[%s169 + $0xd0] sm:$0xff]
        %v222 = vld [vmem:[%s169 + $0xd8] sm:$0xff]
        %v223 = vld [vmem:[%s169 + $0xe0] sm:$0xff]
        %v224 = vld [vmem:[%s169 + $0xe8] sm:$0xff]
        %v225 = vld [vmem:[%s169 + $0xf0] sm:$0xff]
        %v226 = vld [vmem:[%s169 + $0xf8] sm:$0xff]
        %v227 = vld [vmem:[%s169 + $0x100] sm:$0xff]
        %v228 = vld [vmem:[%s169 + $0x108] sm:$0xff]
        %v229 = vld [vmem:[%s169 + $0x110] sm:$0xff]
        %v230 = vld [vmem:[%s169 + $0x118] sm:$0xff]
        %v231 = vld [vmem:[%s169 + $0x120] sm:$0xff]
        %v232 = vld [vmem:[%s169 + $0x128] sm:$0xff]
        %v233 = vld [vmem:[%s169 + $0x130] sm:$0xff]
        %v234 = vld [vmem:[%s169 + $0x138] sm:$0xff]
        %v235 = vld [vmem:[%s169 + $0x140] sm:$0xff]
        %v236 = vld [vmem:[%s169 + $0x148] sm:$0xff]
        %v237 = vld [vmem:[%s169 + $0x150] sm:$0xff]
        %v238 = vld [vmem:[%s169 + $0x158] sm:$0xff]
        %v239 = vld [vmem:[%s169 + $0x160] sm:$0xff]
        %v240 = vld [vmem:[%s169 + $0x168] sm:$0xff]
        %v241 = vld [vmem:[%s169 + $0x170] sm:$0xff]
        %v242 = vld [vmem:[%s169 + $0x178] sm:$0xff]
        %v243 = vld [vmem:[%s169 + $0x180] sm:$0xff]
        %v244 = vld [vmem:[%s169 + $0x188] sm:$0xff]
        %v245 = vld [vmem:[%s169 + $0x190] sm:$0xff]
        %v246 = vld [vmem:[%s169 + $0x198] sm:$0xff]
        %v247 = vld [vmem:[%s169 + $0x1a0] sm:$0xff]
        %v248 = vld [vmem:[%s169 + $0x1a8] sm:$0xff]
        %v249 = vld [vmem:[%s169 + $0x1b0] sm:$0xff]
        %v250 = vld [vmem:[%s169 + $0x1b8] sm:$0xff]
        %v251 = vld [vmem:[%s169 + $0x1c0] sm:$0xff]
        %v252 = vld [vmem:[%s169 + $0x1c8] sm:$0xff]
        %v253 = vld [vmem:[%s169 + $0x1d0] sm:$0xff]
        %v254 = vld [vmem:[%s169 + $0x1d8] sm:$0xff]
        %v255 = vld [vmem:[%s169 + $0x1e0] sm:$0xff]
        %v256 = vld [vmem:[%s169 + $0x1e8] sm:$0xff]
        %v257 = vld [vmem:[%s169 + $0x1f0] sm:$0xff]
        %v258 = vld [vmem:[%s169 + $0x1f8] sm:$0xff]
        %v259 = vld [vmem:[%s169 + $0x200] sm:$0xff]
        %v260 = vld [vmem:[%s169 + $0x208] sm:$0xff]
        %v261 = vld [vmem:[%s169 + $0x210] sm:$0xff]
        %v262 = vld [vmem:[%s169 + $0x218] sm:$0xff]
        %v263 = vld [vmem:[%s169 + $0x220] sm:$0xff]
        %v264 = vld [vmem:[%s169 + $0x228] sm:$0xff]
        %v265 = vld [vmem:[%s169 + $0x230] sm:$0xff]
        %v266 = vld [vmem:[%s169 + $0x238] sm:$0xff]
        %v267 = vld [vmem:[%s169 + $0x240] sm:$0xff]
        %v268 = vld [vmem:[%s169 + $0x248] sm:$0xff]
        %v269 = vld [vmem:[%s169 + $0x250] sm:$0xff]
        %v270 = vld [vmem:[%s169 + $0x258] sm:$0xff]
        %v271 = vld [vmem:[%s169 + $0x260] sm:$0xff]
        %v272 = vld [vmem:[%s169 + $0x268] sm:$0xff]
        %v273 = vld [vmem:[%s169 + $0x270] sm:$0xff]
        %v274 = vld [vmem:[%s169 + $0x278] sm:$0xff]
        %v275 = vld [vmem:[%s169 + $0x280] sm:$0xff]
        %v276 = vld [vmem:[%s169 + $0x288] sm:$0xff]
        %v277 = vld [vmem:[%s169 + $0x290] sm:$0xff]
        %v278 = vld [vmem:[%s169 + $0x298] sm:$0xff]
        %v279 = vld [vmem:[%s169 + $0x2a0] sm:$0xff]
        %v280 = vld [vmem:[%s169 + $0x2a8] sm:$0xff]
        %v281 = vld [vmem:[%s169 + $0x2b0] sm:$0xff]
        %v282 = vld [vmem:[%s169 + $0x2b8] sm:$0xff]
        %v283 = vld [vmem:[%s169 + $0x2c0] sm:$0xff]
        %v284 = vld [vmem:[%s169 + $0x2c8] sm:$0xff]
        %v285 = vld [vmem:[%s169 + $0x2d0] sm:$0xff]
        %v286 = vld [vmem:[%s169 + $0x2d8] sm:$0xff]
        %v287 = vld [vmem:[%s169 + $0x2e0] sm:$0xff]
        %v288 = vld [vmem:[%s169 + $0x2e8] sm:$0xff]
        %v289 = vld [vmem:[%s169 + $0x2f0] sm:$0xff]
        %v290 = vld [vmem:[%s169 + $0x2f8] sm:$0xff]
        %v291 = vld [vmem:[%s169 + $0x300] sm:$0xff]
        %v292 = vld [vmem:[%s169 + $0x308] sm:$0xff]
        %v293 = vld [vmem:[%s169 + $0x310] sm:$0xff]
        %v294 = vld [vmem:[%s169 + $0x318] sm:$0xff]
        %v295 = vld [vmem:[%s169 + $0x320] sm:$0xff]
        %v296 = vld [vmem:[%s169 + $0x328] sm:$0xff]
        %v297 = vld [vmem:[%s169 + $0x330] sm:$0xff]
        %v298 = vld [vmem:[%s169 + $0x338] sm:$0xff]
        %v299 = vld [vmem:[%s169 + $0x340] sm:$0xff]
        %v300 = vld [vmem:[%s169 + $0x348] sm:$0xff]
        %v301 = vld [vmem:[%s169 + $0x350] sm:$0xff]
        %v302 = vld [vmem:[%s169 + $0x358] sm:$0xff]
        %v303 = vld [vmem:[%s169 + $0x360] sm:$0xff]
        %v304 = vld [vmem:[%s169 + $0x368] sm:$0xff]
        %v305 = vld [vmem:[%s169 + $0x370] sm:$0xff]
        %v306 = vld [vmem:[%s169 + $0x378] sm:$0xff]
        %v307 = vld [vmem:[%s169 + $0x380] sm:$0xff]
        %v308 = vld [vmem:[%s169 + $0x388] sm:$0xff]
        %v309 = vld [vmem:[%s169 + $0x390] sm:$0xff]
        %v310 = vld [vmem:[%s169 + $0x398] sm:$0xff]
        %v311 = vld [vmem:[%s169 + $0x3a0] sm:$0xff]
        %v312 = vld [vmem:[%s169 + $0x3a8] sm:$0xff]
        %v313 = vld [vmem:[%s169 + $0x3b0] sm:$0xff]
        %v314 = vld [vmem:[%s169 + $0x3b8] sm:$0xff]
        %v315 = vld [vmem:[%s169 + $0x3c0] sm:$0xff]
        %v316 = vld [vmem:[%s169 + $0x3c8] sm:$0xff]
        %v317 = vld [vmem:[%s169 + $0x3d0] sm:$0xff]
        %v318 = vld [vmem:[%s169 + $0x3d8] sm:$0xff]
        %v319 = vld [vmem:[%s169 + $0x3e0] sm:$0xff]
        %v320 = vld [vmem:[%s169 + $0x3e8] sm:$0xff]
        %v321 = vld [vmem:[%s169 + $0x3f0] sm:$0xff]
        %v322 = vld [vmem:[%s169 + $0x3f8] sm:$0xff]
        %v323 = vld [vmem:[%s169 + $0x400] sm:$0xff]
        %v324 = vld [vmem:[%s169 + $0x408] sm:$0xff]
        %v325 = vld [vmem:[%s169 + $0x410] sm:$0xff]
        %v326 = vld [vmem:[%s169 + $0x418] sm:$0xff]
        %v327 = vld [vmem:[%s169 + $0x420] sm:$0xff]
        %v328 = vld [vmem:[%s169 + $0x428] sm:$0xff]
        %v329 = vld [vmem:[%s169 + $0x430] sm:$0xff]
        %v330 = vld [vmem:[%s169 + $0x438] sm:$0xff]
        %v331 = vld [vmem:[%s169 + $0x440] sm:$0xff]
        %v332 = vld [vmem:[%s169 + $0x448] sm:$0xff]
        %v333 = vld [vmem:[%s169 + $0x450] sm:$0xff]
        %v334 = vld [vmem:[%s169 + $0x458] sm:$0xff]
        %v335 = vld [vmem:[%s169 + $0x460] sm:$0xff]
        %v336 = vld [vmem:[%s169 + $0x468] sm:$0xff]
        %v337 = vld [vmem:[%s169 + $0x470] sm:$0xff]
        %v338 = vld [vmem:[%s169 + $0x478] sm:$0xff]
        %v339 = vld [vmem:[%s169 + $0x480] sm:$0xff]
        %v340 = vld [vmem:[%s169 + $0x488] sm:$0xff]
        %v341 = vld [vmem:[%s169 + $0x490] sm:$0xff]
        %v342 = vld [vmem:[%s169 + $0x498] sm:$0xff]
        %v343 = vld [vmem:[%s169 + $0x4a0] sm:$0xff]
        %v344 = vld [vmem:[%s169 + $0x4a8] sm:$0xff]
        %v345 = vld [vmem:[%s169 + $0x4b0] sm:$0xff]
        %v346 = vld [vmem:[%s169 + $0x4b8] sm:$0xff]
        %v347 = vld [vmem:[%s169 + $0x4c0] sm:$0xff]
        %v348 = vld [vmem:[%s169 + $0x4c8] sm:$0xff]
        %v349 = vld [vmem:[%s169 + $0x4d0] sm:$0xff]
        %v350 = vld [vmem:[%s169 + $0x4d8] sm:$0xff]
        %v351 = vld [vmem:[%s169 + $0x4e0] sm:$0xff]
        %v352 = vld [vmem:[%s169 + $0x4e8] sm:$0xff]
        %v353 = vld [vmem:[%s169 + $0x4f0] sm:$0xff]
        %v354 = vld [vmem:[%s169 + $0x4f8] sm:$0xff]
        %v355 = vld [vmem:[%s169 + $0x500] sm:$0xff]
        %v356 = vld [vmem:[%s169 + $0x508] sm:$0xff]
        %v357 = vld [vmem:[%s169 + $0x510] sm:$0xff]
        %v358 = vld [vmem:[%s169 + $0x518] sm:$0xff]
        %v359 = vld [vmem:[%s169 + $0x520] sm:$0xff]
        %v360 = vld [vmem:[%s169 + $0x528] sm:$0xff]
        %v361 = vld [vmem:[%s169 + $0x530] sm:$0xff]
        %v362 = vld [vmem:[%s169 + $0x538] sm:$0xff]
        %v363 = vld [vmem:[%s169 + $0x540] sm:$0xff]
        %v364 = vld [vmem:[%s169 + $0x548] sm:$0xff]
        %v365 = vld [vmem:[%s169 + $0x550] sm:$0xff]
        %v366 = vld [vmem:[%s169 + $0x558] sm:$0xff]
        %v367 = vld [vmem:[%s169 + $0x560] sm:$0xff]
        %v368 = vld [vmem:[%s169 + $0x568] sm:$0xff]
        %v369 = vld [vmem:[%s169 + $0x570] sm:$0xff]
        %v370 = vld [vmem:[%s169 + $0x578] sm:$0xff]
        %v371 = vld [vmem:[%s169 + $0x580] sm:$0xff]
        %v372 = vld [vmem:[%s169 + $0x588] sm:$0xff]
        %v373 = vld [vmem:[%s169 + $0x590] sm:$0xff]
        %v374 = vld [vmem:[%s169 + $0x598] sm:$0xff]
        %v375 = vld [vmem:[%s169 + $0x5a0] sm:$0xff]
        %v376 = vld [vmem:[%s169 + $0x5a8] sm:$0xff]
        %v377 = vld [vmem:[%s169 + $0x5b0] sm:$0xff]
        %v378 = vld [vmem:[%s169 + $0x5b8] sm:$0xff]
        %v379 = vld [vmem:[%s169 + $0x5c0] sm:$0xff]
        %v380 = vld [vmem:[%s169 + $0x5c8] sm:$0xff]
        %v381 = vld [vmem:[%s169 + $0x5d0] sm:$0xff]
        %v382 = vld [vmem:[%s169 + $0x5d8] sm:$0xff]
        %v383 = vld [vmem:[%s169 + $0x5e0] sm:$0xff]
        %v384 = vld [vmem:[%s169 + $0x5e8] sm:$0xff]
        %v385 = vld [vmem:[%s169 + $0x5f0] sm:$0xff]
        %v386 = vld [vmem:[%s169 + $0x5f8] sm:$0xff]
        %v387 = vld [vmem:[%s169 + $0x600] sm:$0xff]
        %v388 = vld [vmem:[%s169 + $0x608] sm:$0xff]
        %v389 = vld [vmem:[%s169 + $0x610] sm:$0xff]
        %v390 = vld [vmem:[%s169 + $0x618] sm:$0xff]
        %v391 = vld [vmem:[%s169 + $0x620] sm:$0xff]
        %v392 = vld [vmem:[%s169 + $0x628] sm:$0xff]
        %v393 = vld [vmem:[%s169 + $0x630] sm:$0xff]
        %v394 = vld [vmem:[%s169 + $0x638] sm:$0xff]
        %v395 = vld [vmem:[%s169 + $0x640] sm:$0xff]
        %v396 = vld [vmem:[%s169 + $0x648] sm:$0xff]
        %v397 = vld [vmem:[%s169 + $0x650] sm:$0xff]
        %v398 = vld [vmem:[%s169 + $0x658] sm:$0xff]
        %v399 = vld [vmem:[%s169 + $0x660] sm:$0xff]
        %v400 = vld [vmem:[%s169 + $0x668] sm:$0xff]
        %v401 = vld [vmem:[%s169 + $0x670] sm:$0xff]
        %v402 = vld [vmem:[%s169 + $0x678] sm:$0xff]
        %v403 = vld [vmem:[%s169 + $0x680] sm:$0xff]
        %v404 = vld [vmem:[%s169 + $0x688] sm:$0xff]
        %v405 = vld [vmem:[%s169 + $0x690] sm:$0xff]
        %v406 = vld [vmem:[%s169 + $0x698] sm:$0xff]
        %v407 = vld [vmem:[%s169 + $0x6a0] sm:$0xff]
        %v408 = vld [vmem:[%s169 + $0x6a8] sm:$0xff]
        %v409 = vld [vmem:[%s169 + $0x6b0] sm:$0xff]
        %v410 = vld [vmem:[%s169 + $0x6b8] sm:$0xff]
        %v411 = vld [vmem:[%s169 + $0x6c0] sm:$0xff]
        %v412 = vld [vmem:[%s169 + $0x6c8] sm:$0xff]
        %v413 = vld [vmem:[%s169 + $0x6d0] sm:$0xff]
        %v414 = vld [vmem:[%s169 + $0x6d8] sm:$0xff]
        %v415 = vld [vmem:[%s169 + $0x6e0] sm:$0xff]
        %v416 = vld [vmem:[%s169 + $0x6e8] sm:$0xff]
        %v417 = vld [vmem:[%s169 + $0x6f0] sm:$0xff]
        %v418 = vld [vmem:[%s169 + $0x6f8] sm:$0xff]
        %v419 = vld [vmem:[%s169 + $0x700] sm:$0xff]
        %v420 = vld [vmem:[%s169 + $0x708] sm:$0xff]
        %v421 = vld [vmem:[%s169 + $0x710] sm:$0xff]
        %v422 = vld [vmem:[%s169 + $0x718] sm:$0xff]
        %v423 = vld [vmem:[%s169 + $0x720] sm:$0xff]
        %v424 = vld [vmem:[%s169 + $0x728] sm:$0xff]
        %v425 = vld [vmem:[%s169 + $0x730] sm:$0xff]
        %v426 = vld [vmem:[%s169 + $0x738] sm:$0xff]
        %v427 = vld [vmem:[%s169 + $0x740] sm:$0xff]
        %v428 = vld [vmem:[%s169 + $0x748] sm:$0xff]
        %v429 = vld [vmem:[%s169 + $0x750] sm:$0xff]
        %v430 = vld [vmem:[%s169 + $0x758] sm:$0xff]
        %v431 = vld [vmem:[%s169 + $0x760] sm:$0xff]
        %v432 = vld [vmem:[%s169 + $0x768] sm:$0xff]
        %v433 = vld [vmem:[%s169 + $0x770] sm:$0xff]
        %v434 = vld [vmem:[%s169 + $0x778] sm:$0xff]
        %v435 = vld [vmem:[%s169 + $0x780] sm:$0xff]
        %v436 = vld [vmem:[%s169 + $0x788] sm:$0xff]
        %v437 = vld [vmem:[%s169 + $0x790] sm:$0xff]
        %v438 = vld [vmem:[%s169 + $0x798] sm:$0xff]
        %v439 = vld [vmem:[%s169 + $0x7a0] sm:$0xff]
        %v440 = vld [vmem:[%s169 + $0x7a8] sm:$0xff]
        %v441 = vld [vmem:[%s169 + $0x7b0] sm:$0xff]
        %v442 = vld [vmem:[%s169 + $0x7b8] sm:$0xff]
        %v443 = vld [vmem:[%s169 + $0x7c0] sm:$0xff]
        %v444 = vld [vmem:[%s169 + $0x7c8] sm:$0xff]
        %v445 = vld [vmem:[%s169 + $0x7d0] sm:$0xff]
        %v446 = vld [vmem:[%s169 + $0x7d8] sm:$0xff]
        %v447 = vld [vmem:[%s169 + $0x7e0] sm:$0xff]
        %v448 = vld [vmem:[%s169 + $0x7e8] sm:$0xff]
        %v449 = vld [vmem:[%s169 + $0x7f0] sm:$0xff]
        %v450 = vld [vmem:[%s169 + $0x7f8] sm:$0xff]
        %v451 = vld [vmem:[%s169 + $0x800] sm:$0xff]
        %v452 = vld [vmem:[%s169 + $0x808] sm:$0xff]
        %v453 = vld [vmem:[%s169 + $0x810] sm:$0xff]
        %v454 = vld [vmem:[%s169 + $0x818] sm:$0xff]
        %v455 = vld [vmem:[%s169 + $0x820] sm:$0xff]
        %v456 = vld [vmem:[%s169 + $0x828] sm:$0xff]
        %v457 = vld [vmem:[%s169 + $0x830] sm:$0xff]
        %v458 = vld [vmem:[%s169 + $0x838] sm:$0xff]
        %v459 = vld [vmem:[%s169 + $0x840] sm:$0xff]
        %v460 = vld [vmem:[%s169 + $0x848] sm:$0xff]
        %v461 = vld [vmem:[%s169 + $0x850] sm:$0xff]
        %v462 = vld [vmem:[%s169 + $0x858] sm:$0xff]
        %v463 = vld [vmem:[%s169 + $0x860] sm:$0xff]
        %v464 = vld [vmem:[%s169 + $0x868] sm:$0xff]
        %v465 = vld [vmem:[%s169 + $0x870] sm:$0xff]
        %v466 = vld [vmem:[%s169 + $0x878] sm:$0xff]
        %v467 = vld [vmem:[%s169 + $0x880] sm:$0xff]
        %v468 = vld [vmem:[%s169 + $0x888] sm:$0xff]
        %v469 = vld [vmem:[%s169 + $0x890] sm:$0xff]
        %v470 = vld [vmem:[%s169 + $0x898] sm:$0xff]
        %v471 = vld [vmem:[%s169 + $0x8a0] sm:$0xff]
        %v472 = vld [vmem:[%s169 + $0x8a8] sm:$0xff]
        %v473 = vld [vmem:[%s169 + $0x8b0] sm:$0xff]
        %v474 = vld [vmem:[%s169 + $0x8b8] sm:$0xff]
        %v475 = vld [vmem:[%s169 + $0x8c0] sm:$0xff]
        %v476 = vld [vmem:[%s169 + $0x8c8] sm:$0xff]
        %v477 = vld [vmem:[%s169 + $0x8d0] sm:$0xff]
        %v478 = vld [vmem:[%s169 + $0x8d8] sm:$0xff]
        %v479 = vld [vmem:[%s169 + $0x8e0] sm:$0xff]
        %v480 = vld [vmem:[%s169 + $0x8e8] sm:$0xff]
        %v481 = vld [vmem:[%s169 + $0x8f0] sm:$0xff]
        %v482 = vld [vmem:[%s169 + $0x8f8] sm:$0xff]
        %v483 = vld [vmem:[%s169 + $0x900] sm:$0xff]
        %v484 = vld [vmem:[%s169 + $0x908] sm:$0xff]
        %v485 = vld [vmem:[%s169 + $0x910] sm:$0xff]
        %v486 = vld [vmem:[%s169 + $0x918] sm:$0xff]
        %v487 = vld [vmem:[%s169 + $0x920] sm:$0xff]
        %v488 = vld [vmem:[%s169 + $0x928] sm:$0xff]
        %v489 = vld [vmem:[%s169 + $0x930] sm:$0xff]
        %v490 = vld [vmem:[%s169 + $0x938] sm:$0xff]
        %v491 = vld [vmem:[%s169 + $0x940] sm:$0xff]
        %v492 = vld [vmem:[%s169 + $0x948] sm:$0xff]
        %v493 = vld [vmem:[%s169 + $0x950] sm:$0xff]
        %v494 = vld [vmem:[%s169 + $0x958] sm:$0xff]
        %v495 = vld [vmem:[%s169 + $0x960] sm:$0xff]
        %v496 = vld [vmem:[%s169 + $0x968] sm:$0xff]
        %v497 = vld [vmem:[%s169 + $0x970] sm:$0xff]
        %v498 = vld [vmem:[%s169 + $0x978] sm:$0xff]
        %v499 = vld [vmem:[%s169 + $0x980] sm:$0xff]
        %v500 = vld [vmem:[%s169 + $0x988] sm:$0xff]
        %v501 = vld [vmem:[%s169 + $0x990] sm:$0xff]
        %v502 = vld [vmem:[%s169 + $0x998] sm:$0xff]
        %v503 = vld [vmem:[%s169 + $0x9a0] sm:$0xff]
        %v504 = vld [vmem:[%s169 + $0x9a8] sm:$0xff]
        %v505 = vld [vmem:[%s169 + $0x9b0] sm:$0xff]
        %v506 = vld [vmem:[%s169 + $0x9b8] sm:$0xff]
        %v507 = vld [vmem:[%s169 + $0x9c0] sm:$0xff]
        %v508 = vld [vmem:[%s169 + $0x9c8] sm:$0xff]
        %v509 = vld [vmem:[%s169 + $0x9d0] sm:$0xff]
        %v510 = vld [vmem:[%s169 + $0x9d8] sm:$0xff]
        %v511 = vld [vmem:[%s169 + $0x9e0] sm:$0xff]
        %v512 = vld [vmem:[%s169 + $0x9e8] sm:$0xff]
        %v513 = vld [vmem:[%s169 + $0x9f0] sm:$0xff]
        %v514 = vld [vmem:[%s169 + $0x9f8] sm:$0xff]
        %v515 = vld [vmem:[%s169 + $0xa00] sm:$0xff]
        %v516 = vld [vmem:[%s169 + $0xa08] sm:$0xff]
        %v517 = vld [vmem:[%s169 + $0xa10] sm:$0xff]
        %v518 = vld [vmem:[%s169 + $0xa18] sm:$0xff]
        %v519 = vld [vmem:[%s169 + $0xa20] sm:$0xff]
        %v520 = vld [vmem:[%s169 + $0xa28] sm:$0xff]
        %v521 = vld [vmem:[%s169 + $0xa30] sm:$0xff]
        %v522 = vld [vmem:[%s169 + $0xa38] sm:$0xff]
        %v523 = vld [vmem:[%s169 + $0xa40] sm:$0xff]
        %v524 = vld [vmem:[%s169 + $0xa48] sm:$0xff]
        %v525 = vld [vmem:[%s169 + $0xa50] sm:$0xff]
        %v526 = vld [vmem:[%s169 + $0xa58] sm:$0xff]
        %v527 = vld [vmem:[%s169 + $0xa60] sm:$0xff]
        %v528 = vld [vmem:[%s169 + $0xa68] sm:$0xff]
        %v529 = vld [vmem:[%s169 + $0xa70] sm:$0xff]
        %v530 = vld [vmem:[%s169 + $0xa78] sm:$0xff]
        %v531 = vld [vmem:[%s169 + $0xa80] sm:$0xff]
        %v532 = vld [vmem:[%s169 + $0xa88] sm:$0xff]
        %v533 = vld [vmem:[%s169 + $0xa90] sm:$0xff]
        %v534 = vld [vmem:[%s169 + $0xa98] sm:$0xff]
        %v535 = vld [vmem:[%s169 + $0xaa0] sm:$0xff]
        %v536 = vld [vmem:[%s169 + $0xaa8] sm:$0xff]
        %v537 = vld [vmem:[%s169 + $0xab0] sm:$0xff]
        %v538 = vld [vmem:[%s169 + $0xab8] sm:$0xff]
        %v539 = vld [vmem:[%s169 + $0xac0] sm:$0xff]
        %v540 = vld [vmem:[%s169 + $0xac8] sm:$0xff]
        %v541 = vld [vmem:[%s169 + $0xad0] sm:$0xff]
        %v542 = vld [vmem:[%s169 + $0xad8] sm:$0xff]
        %v543 = vld [vmem:[%s169 + $0xae0] sm:$0xff]
        %v544 = vld [vmem:[%s169 + $0xae8] sm:$0xff]
        %v545 = vld [vmem:[%s169 + $0xaf0] sm:$0xff]
        %v546 = vld [vmem:[%s169 + $0xaf8] sm:$0xff]
        %v547 = vld [vmem:[%s169 + $0xb00] sm:$0xff]
        %v548 = vld [vmem:[%s169 + $0xb08] sm:$0xff]
        %v549 = vld [vmem:[%s169 + $0xb10] sm:$0xff]
        %v550 = vld [vmem:[%s169 + $0xb18] sm:$0xff]
        %v551 = vld [vmem:[%s169 + $0xb20] sm:$0xff]
        %v552 = vld [vmem:[%s169 + $0xb28] sm:$0xff]
        %v553 = vld [vmem:[%s169 + $0xb30] sm:$0xff]
        %v554 = vld [vmem:[%s169 + $0xb38] sm:$0xff]
        %v555 = vld [vmem:[%s169 + $0xb40] sm:$0xff]
        %v556 = vld [vmem:[%s169 + $0xb48] sm:$0xff]
        %v557 = vld [vmem:[%s169 + $0xb50] sm:$0xff]
        %v558 = vld [vmem:[%s169 + $0xb58] sm:$0xff]
        %v559 = vld [vmem:[%s169 + $0xb60] sm:$0xff]
        %v560 = vld [vmem:[%s169 + $0xb68] sm:$0xff]
        %v561 = vld [vmem:[%s169 + $0xb70] sm:$0xff]
        %v562 = vld [vmem:[%s169 + $0xb78] sm:$0xff]
        %v563 = vld [vmem:[%s169 + $0xb80] sm:$0xff]
        %v564 = vld [vmem:[%s169 + $0xb88] sm:$0xff]
        %v565 = vld [vmem:[%s169 + $0xb90] sm:$0xff]
        %v566 = vld [vmem:[%s169 + $0xb98] sm:$0xff]
        %v567 = vld [vmem:[%s169 + $0xba0] sm:$0xff]
        %v568 = vld [vmem:[%s169 + $0xba8] sm:$0xff]
        %v569 = vld [vmem:[%s169 + $0xbb0] sm:$0xff]
        %v570 = vld [vmem:[%s169 + $0xbb8] sm:$0xff]
        %v571 = vld [vmem:[%s169 + $0xbc0] sm:$0xff]
        %v572 = vld [vmem:[%s169 + $0xbc8] sm:$0xff]
        %v573 = vld [vmem:[%s169 + $0xbd0] sm:$0xff]
        %v574 = vld [vmem:[%s169 + $0xbd8] sm:$0xff]
        %v575 = vld [vmem:[%s169 + $0xbe0] sm:$0xff]
        %v576 = vld [vmem:[%s169 + $0xbe8] sm:$0xff]
        %v577 = vld [vmem:[%s169 + $0xbf0] sm:$0xff]
        %v578 = vld [vmem:[%s169 + $0xbf8] sm:$0xff]
        %v579 = vld [vmem:[%s169 + $0xc00] sm:$0xff]
        %v580 = vld [vmem:[%s169 + $0xc08] sm:$0xff]
        %v581 = vld [vmem:[%s169 + $0xc10] sm:$0xff]
        %v582 = vld [vmem:[%s169 + $0xc18] sm:$0xff]
        %v583 = vld [vmem:[%s169 + $0xc20] sm:$0xff]
        %v584 = vld [vmem:[%s169 + $0xc28] sm:$0xff]
        %v585 = vld [vmem:[%s169 + $0xc30] sm:$0xff]
        %v586 = vld [vmem:[%s169 + $0xc38] sm:$0xff]
        %v587 = vld [vmem:[%s169 + $0xc40] sm:$0xff]
        %v588 = vld [vmem:[%s169 + $0xc48] sm:$0xff]
        %v589 = vld [vmem:[%s169 + $0xc50] sm:$0xff]
        %v590 = vld [vmem:[%s169 + $0xc58] sm:$0xff]
        %v591 = vld [vmem:[%s169 + $0xc60] sm:$0xff]
        %v592 = vld [vmem:[%s169 + $0xc68] sm:$0xff]
        %v593 = vld [vmem:[%s169 + $0xc70] sm:$0xff]
        %v594 = vld [vmem:[%s169 + $0xc78] sm:$0xff]
        %v595 = vld [vmem:[%s169 + $0xc80] sm:$0xff]
        %v596 = vld [vmem:[%s169 + $0xc88] sm:$0xff]
        %v597 = vld [vmem:[%s169 + $0xc90] sm:$0xff]
        %v598 = vld [vmem:[%s169 + $0xc98] sm:$0xff]
        %v599 = vld [vmem:[%s169 + $0xca0] sm:$0xff]
        %v600 = vld [vmem:[%s169 + $0xca8] sm:$0xff]
        %v601 = vld [vmem:[%s169 + $0xcb0] sm:$0xff]
        %v602 = vld [vmem:[%s169 + $0xcb8] sm:$0xff]
        %v603 = vld [vmem:[%s169 + $0xcc0] sm:$0xff]
        %v604 = vld [vmem:[%s169 + $0xcc8] sm:$0xff]
        %v605 = vld [vmem:[%s169 + $0xcd0] sm:$0xff]
        %v606 = vld [vmem:[%s169 + $0xcd8] sm:$0xff]
        %v607 = vld [vmem:[%s169 + $0xce0] sm:$0xff]
        %v608 = vld [vmem:[%s169 + $0xce8] sm:$0xff]
        %v609 = vld [vmem:[%s169 + $0xcf0] sm:$0xff]
        %v610 = vld [vmem:[%s169 + $0xcf8] sm:$0xff]
        %v611 = vld [vmem:[%s169 + $0xd00] sm:$0xff]
        %v612 = vld [vmem:[%s169 + $0xd08] sm:$0xff]
        %v613 = vld [vmem:[%s169 + $0xd10] sm:$0xff]
        %v614 = vld [vmem:[%s169 + $0xd18] sm:$0xff]
        %v615 = vld [vmem:[%s169 + $0xd20] sm:$0xff]
        %v616 = vld [vmem:[%s169 + $0xd28] sm:$0xff]
        %v617 = vld [vmem:[%s169 + $0xd30] sm:$0xff]
        %v618 = vld [vmem:[%s169 + $0xd38] sm:$0xff]
        %v619 = vld [vmem:[%s169 + $0xd40] sm:$0xff]
        %v620 = vld [vmem:[%s169 + $0xd48] sm:$0xff]
        %v621 = vld [vmem:[%s169 + $0xd50] sm:$0xff]
        %v622 = vld [vmem:[%s169 + $0xd58] sm:$0xff]
        %v623 = vld [vmem:[%s169 + $0xd60] sm:$0xff]
        %v624 = vld [vmem:[%s169 + $0xd68] sm:$0xff]
        %v625 = vld [vmem:[%s169 + $0xd70] sm:$0xff]
        %v626 = vld [vmem:[%s169 + $0xd78] sm:$0xff]
        %v627 = vld [vmem:[%s169 + $0xd80] sm:$0xff]
        %v628 = vld [vmem:[%s169 + $0xd88] sm:$0xff]
        %v629 = vld [vmem:[%s169 + $0xd90] sm:$0xff]
        %v630 = vld [vmem:[%s169 + $0xd98] sm:$0xff]
        %v631 = vld [vmem:[%s169 + $0xda0] sm:$0xff]
        %v632 = vld [vmem:[%s169 + $0xda8] sm:$0xff]
        %v633 = vld [vmem:[%s169 + $0xdb0] sm:$0xff]
        %v634 = vld [vmem:[%s169 + $0xdb8] sm:$0xff]
        %v635 = vld [vmem:[%s169 + $0xdc0] sm:$0xff]
        %v636 = vld [vmem:[%s169 + $0xdc8] sm:$0xff]
        %v637 = vld [vmem:[%s169 + $0xdd0] sm:$0xff]
        %v638 = vld [vmem:[%s169 + $0xdd8] sm:$0xff]
        %v639 = vld [vmem:[%s169 + $0xde0] sm:$0xff]
        %v640 = vld [vmem:[%s169 + $0xde8] sm:$0xff]
        %v641 = vld [vmem:[%s169 + $0xdf0] sm:$0xff]
        %v642 = vld [vmem:[%s169 + $0xdf8] sm:$0xff]
        %v643 = vld [vmem:[%s169 + $0xe00] sm:$0xff]
        %v644 = vld [vmem:[%s169 + $0xe08] sm:$0xff]
        %v645 = vld [vmem:[%s169 + $0xe10] sm:$0xff]
        %v646 = vld [vmem:[%s169 + $0xe18] sm:$0xff]
        %v647 = vld [vmem:[%s169 + $0xe20] sm:$0xff]
        %v648 = vld [vmem:[%s169 + $0xe28] sm:$0xff]
        %v649 = vld [vmem:[%s169 + $0xe30] sm:$0xff]
        %v650 = vld [vmem:[%s169 + $0xe38] sm:$0xff]
        %v651 = vld [vmem:[%s169 + $0xe40] sm:$0xff]
        %v652 = vld [vmem:[%s169 + $0xe48] sm:$0xff]
        %v653 = vld [vmem:[%s169 + $0xe50] sm:$0xff]
        %v654 = vld [vmem:[%s169 + $0xe58] sm:$0xff]
        %v655 = vld [vmem:[%s169 + $0xe60] sm:$0xff]
        %v656 = vld [vmem:[%s169 + $0xe68] sm:$0xff]
        %v657 = vld [vmem:[%s169 + $0xe70] sm:$0xff]
        %v658 = vld [vmem:[%s169 + $0xe78] sm:$0xff]
        %v659 = vld [vmem:[%s169 + $0xe80] sm:$0xff]
        %v660 = vld [vmem:[%s169 + $0xe88] sm:$0xff]
        %v661 = vld [vmem:[%s169 + $0xe90] sm:$0xff]
        %v662 = vld [vmem:[%s169 + $0xe98] sm:$0xff]
        %v663 = vld [vmem:[%s169 + $0xea0] sm:$0xff]
        %v664 = vld [vmem:[%s169 + $0xea8] sm:$0xff]
        %v665 = vld [vmem:[%s169 + $0xeb0] sm:$0xff]
        %v666 = vld [vmem:[%s169 + $0xeb8] sm:$0xff]
        %v667 = vld [vmem:[%s169 + $0xec0] sm:$0xff]
        %v668 = vld [vmem:[%s169 + $0xec8] sm:$0xff]
        %v669 = vld [vmem:[%s169 + $0xed0] sm:$0xff]
        %v670 = vld [vmem:[%s169 + $0xed8] sm:$0xff]
        %v671 = vld [vmem:[%s169 + $0xee0] sm:$0xff]
        %v672 = vld [vmem:[%s169 + $0xee8] sm:$0xff]
        %v673 = vld [vmem:[%s169 + $0xef0] sm:$0xff]
        %v674 = vld [vmem:[%s169 + $0xef8] sm:$0xff]
        %v675 = vld [vmem:[%s169 + $0xf00] sm:$0xff]
        %v676 = vld [vmem:[%s169 + $0xf08] sm:$0xff]
        %v677 = vld [vmem:[%s169 + $0xf10] sm:$0xff]
        %v678 = vld [vmem:[%s169 + $0xf18] sm:$0xff]
        %v679 = vld [vmem:[%s169 + $0xf20] sm:$0xff]
        %v680 = vld [vmem:[%s169 + $0xf28] sm:$0xff]
        %v681 = vld [vmem:[%s169 + $0xf30] sm:$0xff]
        %v682 = vld [vmem:[%s169 + $0xf38] sm:$0xff]
        %v683 = vld [vmem:[%s169 + $0xf40] sm:$0xff]
        %v684 = vld [vmem:[%s169 + $0xf48] sm:$0xff]
        %v685 = vld [vmem:[%s169 + $0xf50] sm:$0xff]
        %v686 = vld [vmem:[%s169 + $0xf58] sm:$0xff]
        %v687 = vld [vmem:[%s169 + $0xf60] sm:$0xff]
        %v688 = vld [vmem:[%s169 + $0xf68] sm:$0xff]
        %v689 = vld [vmem:[%s169 + $0xf70] sm:$0xff]
        %v690 = vld [vmem:[%s169 + $0xf78] sm:$0xff]
        %v691 = vld [vmem:[%s169 + $0xf80] sm:$0xff]
        %v692 = vld [vmem:[%s169 + $0xf88] sm:$0xff]
        %v693 = vld [vmem:[%s169 + $0xf90] sm:$0xff]
        %v694 = vld [vmem:[%s169 + $0xf98] sm:$0xff]
        %v695 = vld [vmem:[%s169 + $0xfa0] sm:$0xff]
        %v696 = vld [vmem:[%s169 + $0xfa8] sm:$0xff]
        %v697 = vld [vmem:[%s169 + $0xfb0] sm:$0xff]
        %v698 = vld [vmem:[%s169 + $0xfb8] sm:$0xff]
        %v699 = vld [vmem:[%s169 + $0xfc0] sm:$0xff]
        %v700 = vld [vmem:[%s169 + $0xfc8] sm:$0xff]
        %v701 = vld [vmem:[%s169 + $0xfd0] sm:$0xff]
        %v702 = vld [vmem:[%s169 + $0xfd8] sm:$0xff]
        %v703 = vld [vmem:[%s169 + $0xfe0] sm:$0xff]
        %v704 = vld [vmem:[%s169 + $0xfe8] sm:$0xff]
        %v705 = vld [vmem:[%s169 + $0xff0] sm:$0xff]
        %v706 = vld [vmem:[%s169 + $0xff8] sm:$0xff]
        %v707 = vstv %s194
        %v708 = vmul.f32 %v707, %v195
        %v709 = vmul.f32 %v707, %v196
        %v710 = vmul.f32 %v707, %v197
        %v711 = vmul.f32 %v707, %v198
        %v712 = vmul.f32 %v707, %v199
        %v713 = vmul.f32 %v707, %v200
        %v714 = vmul.f32 %v707, %v201
        %v715 = vmul.f32 %v707, %v202
        %v716 = vmul.f32 %v707, %v203
        %v717 = vmul.f32 %v707, %v204
        %v718 = vmul.f32 %v707, %v205
        %v719 = vmul.f32 %v707, %v206
        %v720 = vmul.f32 %v707, %v207
        %v721 = vmul.f32 %v707, %v208
        %v722 = vmul.f32 %v707, %v209
        %v723 = vmul.f32 %v707, %v210
        %v724 = vmul.f32 %v707, %v211
        %v725 = vmul.f32 %v707, %v212
        %v726 = vmul.f32 %v707, %v213
        %v727 = vmul.f32 %v707, %v214
        %v728 = vmul.f32 %v707, %v215
        %v729 = vmul.f32 %v707, %v216
        %v730 = vmul.f32 %v707, %v217
        %v731 = vmul.f32 %v707, %v218
        %v732 = vmul.f32 %v707, %v219
        %v733 = vmul.f32 %v707, %v220
        %v734 = vmul.f32 %v707, %v221
        %v735 = vmul.f32 %v707, %v222
        %v736 = vmul.f32 %v707, %v223
        %v737 = vmul.f32 %v707, %v224
        %v738 = vmul.f32 %v707, %v225
        %v739 = vmul.f32 %v707, %v226
        %v740 = vmul.f32 %v707, %v227
        %v741 = vmul.f32 %v707, %v228
        %v742 = vmul.f32 %v707, %v229
        %v743 = vmul.f32 %v707, %v230
        %v744 = vmul.f32 %v707, %v231
        %v745 = vmul.f32 %v707, %v232
        %v746 = vmul.f32 %v707, %v233
        %v747 = vmul.f32 %v707, %v234
        %v748 = vmul.f32 %v707, %v235
        %v749 = vmul.f32 %v707, %v236
        %v750 = vmul.f32 %v707, %v237
        %v751 = vmul.f32 %v707, %v238
        %v752 = vmul.f32 %v707, %v239
        %v753 = vmul.f32 %v707, %v240
        %v754 = vmul.f32 %v707, %v241
        %v755 = vmul.f32 %v707, %v242
        %v756 = vmul.f32 %v707, %v243
        %v757 = vmul.f32 %v707, %v244
        %v758 = vmul.f32 %v707, %v245
        %v759 = vmul.f32 %v707, %v246
        %v760 = vmul.f32 %v707, %v247
        %v761 = vmul.f32 %v707, %v248
        %v762 = vmul.f32 %v707, %v249
        %v763 = vmul.f32 %v707, %v250
        %v764 = vmul.f32 %v707, %v251
        %v765 = vmul.f32 %v707, %v252
        %v766 = vmul.f32 %v707, %v253
        %v767 = vmul.f32 %v707, %v254
        %v768 = vmul.f32 %v707, %v255
        %v769 = vmul.f32 %v707, %v256
        %v770 = vmul.f32 %v707, %v257
        %v771 = vmul.f32 %v707, %v258
        %v772 = vmul.f32 %v707, %v259
        %v773 = vmul.f32 %v707, %v260
        %v774 = vmul.f32 %v707, %v261
        %v775 = vmul.f32 %v707, %v262
        %v776 = vmul.f32 %v707, %v263
        %v777 = vmul.f32 %v707, %v264
        %v778 = vmul.f32 %v707, %v265
        %v779 = vmul.f32 %v707, %v266
        %v780 = vmul.f32 %v707, %v267
        %v781 = vmul.f32 %v707, %v268
        %v782 = vmul.f32 %v707, %v269
        %v783 = vmul.f32 %v707, %v270
        %v784 = vmul.f32 %v707, %v271
        %v785 = vmul.f32 %v707, %v272
        %v786 = vmul.f32 %v707, %v273
        %v787 = vmul.f32 %v707, %v274
        %v788 = vmul.f32 %v707, %v275
        %v789 = vmul.f32 %v707, %v276
        %v790 = vmul.f32 %v707, %v277
        %v791 = vmul.f32 %v707, %v278
        %v792 = vmul.f32 %v707, %v279
        %v793 = vmul.f32 %v707, %v280
        %v794 = vmul.f32 %v707, %v281
        %v795 = vmul.f32 %v707, %v282
        %v796 = vmul.f32 %v707, %v283
        %v797 = vmul.f32 %v707, %v284
        %v798 = vmul.f32 %v707, %v285
        %v799 = vmul.f32 %v707, %v286
        %v800 = vmul.f32 %v707, %v287
        %v801 = vmul.f32 %v707, %v288
        %v802 = vmul.f32 %v707, %v289
        %v803 = vmul.f32 %v707, %v290
        %v804 = vmul.f32 %v707, %v291
        %v805 = vmul.f32 %v707, %v292
        %v806 = vmul.f32 %v707, %v293
        %v807 = vmul.f32 %v707, %v294
        %v808 = vmul.f32 %v707, %v295
        %v809 = vmul.f32 %v707, %v296
        %v810 = vmul.f32 %v707, %v297
        %v811 = vmul.f32 %v707, %v298
        %v812 = vmul.f32 %v707, %v299
        %v813 = vmul.f32 %v707, %v300
        %v814 = vmul.f32 %v707, %v301
        %v815 = vmul.f32 %v707, %v302
        %v816 = vmul.f32 %v707, %v303
        %v817 = vmul.f32 %v707, %v304
        %v818 = vmul.f32 %v707, %v305
        %v819 = vmul.f32 %v707, %v306
        %v820 = vmul.f32 %v707, %v307
        %v821 = vmul.f32 %v707, %v308
        %v822 = vmul.f32 %v707, %v309
        %v823 = vmul.f32 %v707, %v310
        %v824 = vmul.f32 %v707, %v311
        %v825 = vmul.f32 %v707, %v312
        %v826 = vmul.f32 %v707, %v313
        %v827 = vmul.f32 %v707, %v314
        %v828 = vmul.f32 %v707, %v315
        %v829 = vmul.f32 %v707, %v316
        %v830 = vmul.f32 %v707, %v317
        %v831 = vmul.f32 %v707, %v318
        %v832 = vmul.f32 %v707, %v319
        %v833 = vmul.f32 %v707, %v320
        %v834 = vmul.f32 %v707, %v321
        %v835 = vmul.f32 %v707, %v322
        %v836 = vmul.f32 %v707, %v323
        %v837 = vmul.f32 %v707, %v324
        %v838 = vmul.f32 %v707, %v325
        %v839 = vmul.f32 %v707, %v326
        %v840 = vmul.f32 %v707, %v327
        %v841 = vmul.f32 %v707, %v328
        %v842 = vmul.f32 %v707, %v329
        %v843 = vmul.f32 %v707, %v330
        %v844 = vmul.f32 %v707, %v331
        %v845 = vmul.f32 %v707, %v332
        %v846 = vmul.f32 %v707, %v333
        %v847 = vmul.f32 %v707, %v334
        %v848 = vmul.f32 %v707, %v335
        %v849 = vmul.f32 %v707, %v336
        %v850 = vmul.f32 %v707, %v337
        %v851 = vmul.f32 %v707, %v338
        %v852 = vmul.f32 %v707, %v339
        %v853 = vmul.f32 %v707, %v340
        %v854 = vmul.f32 %v707, %v341
        %v855 = vmul.f32 %v707, %v342
        %v856 = vmul.f32 %v707, %v343
        %v857 = vmul.f32 %v707, %v344
        %v858 = vmul.f32 %v707, %v345
        %v859 = vmul.f32 %v707, %v346
        %v860 = vmul.f32 %v707, %v347
        %v861 = vmul.f32 %v707, %v348
        %v862 = vmul.f32 %v707, %v349
        %v863 = vmul.f32 %v707, %v350
        %v864 = vmul.f32 %v707, %v351
        %v865 = vmul.f32 %v707, %v352
        %v866 = vmul.f32 %v707, %v353
        %v867 = vmul.f32 %v707, %v354
        %v868 = vmul.f32 %v707, %v355
        %v869 = vmul.f32 %v707, %v356
        %v870 = vmul.f32 %v707, %v357
        %v871 = vmul.f32 %v707, %v358
        %v872 = vmul.f32 %v707, %v359
        %v873 = vmul.f32 %v707, %v360
        %v874 = vmul.f32 %v707, %v361
        %v875 = vmul.f32 %v707, %v362
        %v876 = vmul.f32 %v707, %v363
        %v877 = vmul.f32 %v707, %v364
        %v878 = vmul.f32 %v707, %v365
        %v879 = vmul.f32 %v707, %v366
        %v880 = vmul.f32 %v707, %v367
        %v881 = vmul.f32 %v707, %v368
        %v882 = vmul.f32 %v707, %v369
        %v883 = vmul.f32 %v707, %v370
        %v884 = vmul.f32 %v707, %v371
        %v885 = vmul.f32 %v707, %v372
        %v886 = vmul.f32 %v707, %v373
        %v887 = vmul.f32 %v707, %v374
        %v888 = vmul.f32 %v707, %v375
        %v889 = vmul.f32 %v707, %v376
        %v890 = vmul.f32 %v707, %v377
        %v891 = vmul.f32 %v707, %v378
        %v892 = vmul.f32 %v707, %v379
        %v893 = vmul.f32 %v707, %v380
        %v894 = vmul.f32 %v707, %v381
        %v895 = vmul.f32 %v707, %v382
        %v896 = vmul.f32 %v707, %v383
        %v897 = vmul.f32 %v707, %v384
        %v898 = vmul.f32 %v707, %v385
        %v899 = vmul.f32 %v707, %v386
        %v900 = vmul.f32 %v707, %v387
        %v901 = vmul.f32 %v707, %v388
        %v902 = vmul.f32 %v707, %v389
        %v903 = vmul.f32 %v707, %v390
        %v904 = vmul.f32 %v707, %v391
        %v905 = vmul.f32 %v707, %v392
        %v906 = vmul.f32 %v707, %v393
        %v907 = vmul.f32 %v707, %v394
        %v908 = vmul.f32 %v707, %v395
        %v909 = vmul.f32 %v707, %v396
        %v910 = vmul.f32 %v707, %v397
        %v911 = vmul.f32 %v707, %v398
        %v912 = vmul.f32 %v707, %v399
        %v913 = vmul.f32 %v707, %v400
        %v914 = vmul.f32 %v707, %v401
        %v915 = vmul.f32 %v707, %v402
        %v916 = vmul.f32 %v707, %v403
        %v917 = vmul.f32 %v707, %v404
        %v918 = vmul.f32 %v707, %v405
        %v919 = vmul.f32 %v707, %v406
        %v920 = vmul.f32 %v707, %v407
        %v921 = vmul.f32 %v707, %v408
        %v922 = vmul.f32 %v707, %v409
        %v923 = vmul.f32 %v707, %v410
        %v924 = vmul.f32 %v707, %v411
        %v925 = vmul.f32 %v707, %v412
        %v926 = vmul.f32 %v707, %v413
        %v927 = vmul.f32 %v707, %v414
        %v928 = vmul.f32 %v707, %v415
        %v929 = vmul.f32 %v707, %v416
        %v930 = vmul.f32 %v707, %v417
        %v931 = vmul.f32 %v707, %v418
        %v932 = vmul.f32 %v707, %v419
        %v933 = vmul.f32 %v707, %v420
        %v934 = vmul.f32 %v707, %v421
        %v935 = vmul.f32 %v707, %v422
        %v936 = vmul.f32 %v707, %v423
        %v937 = vmul.f32 %v707, %v424
        %v938 = vmul.f32 %v707, %v425
        %v939 = vmul.f32 %v707, %v426
        %v940 = vmul.f32 %v707, %v427
        %v941 = vmul.f32 %v707, %v428
        %v942 = vmul.f32 %v707, %v429
        %v943 = vmul.f32 %v707, %v430
        %v944 = vmul.f32 %v707, %v431
        %v945 = vmul.f32 %v707, %v432
        %v946 = vmul.f32 %v707, %v433
        %v947 = vmul.f32 %v707, %v434
        %v948 = vmul.f32 %v707, %v435
        %v949 = vmul.f32 %v707, %v436
        %v950 = vmul.f32 %v707, %v437
        %v951 = vmul.f32 %v707, %v438
        %v952 = vmul.f32 %v707, %v439
        %v953 = vmul.f32 %v707, %v440
        %v954 = vmul.f32 %v707, %v441
        %v955 = vmul.f32 %v707, %v442
        %v956 = vmul.f32 %v707, %v443
        %v957 = vmul.f32 %v707, %v444
        %v958 = vmul.f32 %v707, %v445
        %v959 = vmul.f32 %v707, %v446
        %v960 = vmul.f32 %v707, %v447
        %v961 = vmul.f32 %v707, %v448
        %v962 = vmul.f32 %v707, %v449
        %v963 = vmul.f32 %v707, %v450
        %v964 = vmul.f32 %v707, %v451
        %v965 = vmul.f32 %v707, %v452
        %v966 = vmul.f32 %v707, %v453
        %v967 = vmul.f32 %v707, %v454
        %v968 = vmul.f32 %v707, %v455
        %v969 = vmul.f32 %v707, %v456
        %v970 = vmul.f32 %v707, %v457
        %v971 = vmul.f32 %v707, %v458
        %v972 = vmul.f32 %v707, %v459
        %v973 = vmul.f32 %v707, %v460
        %v974 = vmul.f32 %v707, %v461
        %v975 = vmul.f32 %v707, %v462
        %v976 = vmul.f32 %v707, %v463
        %v977 = vmul.f32 %v707, %v464
        %v978 = vmul.f32 %v707, %v465
        %v979 = vmul.f32 %v707, %v466
        %v980 = vmul.f32 %v707, %v467
        %v981 = vmul.f32 %v707, %v468
        %v982 = vmul.f32 %v707, %v469
        %v983 = vmul.f32 %v707, %v470
        %v984 = vmul.f32 %v707, %v471
        %v985 = vmul.f32 %v707, %v472
        %v986 = vmul.f32 %v707, %v473
        %v987 = vmul.f32 %v707, %v474
        %v988 = vmul.f32 %v707, %v475
        %v989 = vmul.f32 %v707, %v476
        %v990 = vmul.f32 %v707, %v477
        %v991 = vmul.f32 %v707, %v478
        %v992 = vmul.f32 %v707, %v479
        %v993 = vmul.f32 %v707, %v480
        %v994 = vmul.f32 %v707, %v481
        %v995 = vmul.f32 %v707, %v482
        %v996 = vmul.f32 %v707, %v483
        %v997 = vmul.f32 %v707, %v484
        %v998 = vmul.f32 %v707, %v485
        %v999 = vmul.f32 %v707, %v486
        %v1000 = vmul.f32 %v707, %v487
        %v1001 = vmul.f32 %v707, %v488
        %v1002 = vmul.f32 %v707, %v489
        %v1003 = vmul.f32 %v707, %v490
        %v1004 = vmul.f32 %v707, %v491
        %v1005 = vmul.f32 %v707, %v492
        %v1006 = vmul.f32 %v707, %v493
        %v1007 = vmul.f32 %v707, %v494
        %v1008 = vmul.f32 %v707, %v495
        %v1009 = vmul.f32 %v707, %v496
        %v1010 = vmul.f32 %v707, %v497
        %v1011 = vmul.f32 %v707, %v498
        %v1012 = vmul.f32 %v707, %v499
        %v1013 = vmul.f32 %v707, %v500
        %v1014 = vmul.f32 %v707, %v501
        %v1015 = vmul.f32 %v707, %v502
        %v1016 = vmul.f32 %v707, %v503
        %v1017 = vmul.f32 %v707, %v504
        %v1018 = vmul.f32 %v707, %v505
        %v1019 = vmul.f32 %v707, %v506
        %v1020 = vmul.f32 %v707, %v507
        %v1021 = vmul.f32 %v707, %v508
        %v1022 = vmul.f32 %v707, %v509
        %v1023 = vmul.f32 %v707, %v510
        %v1024 = vmul.f32 %v707, %v511
        %v1025 = vmul.f32 %v707, %v512
        %v1026 = vmul.f32 %v707, %v513
        %v1027 = vmul.f32 %v707, %v514
        %v1028 = vmul.f32 %v707, %v515
        %v1029 = vmul.f32 %v707, %v516
        %v1030 = vmul.f32 %v707, %v517
        %v1031 = vmul.f32 %v707, %v518
        %v1032 = vmul.f32 %v707, %v519
        %v1033 = vmul.f32 %v707, %v520
        %v1034 = vmul.f32 %v707, %v521
        %v1035 = vmul.f32 %v707, %v522
        %v1036 = vmul.f32 %v707, %v523
        %v1037 = vmul.f32 %v707, %v524
        %v1038 = vmul.f32 %v707, %v525
        %v1039 = vmul.f32 %v707, %v526
        %v1040 = vmul.f32 %v707, %v527
        %v1041 = vmul.f32 %v707, %v528
        %v1042 = vmul.f32 %v707, %v529
        %v1043 = vmul.f32 %v707, %v530
        %v1044 = vmul.f32 %v707, %v531
        %v1045 = vmul.f32 %v707, %v532
        %v1046 = vmul.f32 %v707, %v533
        %v1047 = vmul.f32 %v707, %v534
        %v1048 = vmul.f32 %v707, %v535
        %v1049 = vmul.f32 %v707, %v536
        %v1050 = vmul.f32 %v707, %v537
        %v1051 = vmul.f32 %v707, %v538
        %v1052 = vmul.f32 %v707, %v539
        %v1053 = vmul.f32 %v707, %v540
        %v1054 = vmul.f32 %v707, %v541
        %v1055 = vmul.f32 %v707, %v542
        %v1056 = vmul.f32 %v707, %v543
        %v1057 = vmul.f32 %v707, %v544
        %v1058 = vmul.f32 %v707, %v545
        %v1059 = vmul.f32 %v707, %v546
        %v1060 = vmul.f32 %v707, %v547
        %v1061 = vmul.f32 %v707, %v548
        %v1062 = vmul.f32 %v707, %v549
        %v1063 = vmul.f32 %v707, %v550
        %v1064 = vmul.f32 %v707, %v551
        %v1065 = vmul.f32 %v707, %v552
        %v1066 = vmul.f32 %v707, %v553
        %v1067 = vmul.f32 %v707, %v554
        %v1068 = vmul.f32 %v707, %v555
        %v1069 = vmul.f32 %v707, %v556
        %v1070 = vmul.f32 %v707, %v557
        %v1071 = vmul.f32 %v707, %v558
        %v1072 = vmul.f32 %v707, %v559
        %v1073 = vmul.f32 %v707, %v560
        %v1074 = vmul.f32 %v707, %v561
        %v1075 = vmul.f32 %v707, %v562
        %v1076 = vmul.f32 %v707, %v563
        %v1077 = vmul.f32 %v707, %v564
        %v1078 = vmul.f32 %v707, %v565
        %v1079 = vmul.f32 %v707, %v566
        %v1080 = vmul.f32 %v707, %v567
        %v1081 = vmul.f32 %v707, %v568
        %v1082 = vmul.f32 %v707, %v569
        %v1083 = vmul.f32 %v707, %v570
        %v1084 = vmul.f32 %v707, %v571
        %v1085 = vmul.f32 %v707, %v572
        %v1086 = vmul.f32 %v707, %v573
        %v1087 = vmul.f32 %v707, %v574
        %v1088 = vmul.f32 %v707, %v575
        %v1089 = vmul.f32 %v707, %v576
        %v1090 = vmul.f32 %v707, %v577
        %v1091 = vmul.f32 %v707, %v578
        %v1092 = vmul.f32 %v707, %v579
        %v1093 = vmul.f32 %v707, %v580
        %v1094 = vmul.f32 %v707, %v581
        %v1095 = vmul.f32 %v707, %v582
        %v1096 = vmul.f32 %v707, %v583
        %v1097 = vmul.f32 %v707, %v584
        %v1098 = vmul.f32 %v707, %v585
        %v1099 = vmul.f32 %v707, %v586
        %v1100 = vmul.f32 %v707, %v587
        %v1101 = vmul.f32 %v707, %v588
        %v1102 = vmul.f32 %v707, %v589
        %v1103 = vmul.f32 %v707, %v590
        %v1104 = vmul.f32 %v707, %v591
        %v1105 = vmul.f32 %v707, %v592
        %v1106 = vmul.f32 %v707, %v593
        %v1107 = vmul.f32 %v707, %v594
        %v1108 = vmul.f32 %v707, %v595
        %v1109 = vmul.f32 %v707, %v596
        %v1110 = vmul.f32 %v707, %v597
        %v1111 = vmul.f32 %v707, %v598
        %v1112 = vmul.f32 %v707, %v599
        %v1113 = vmul.f32 %v707, %v600
        %v1114 = vmul.f32 %v707, %v601
        %v1115 = vmul.f32 %v707, %v602
        %v1116 = vmul.f32 %v707, %v603
        %v1117 = vmul.f32 %v707, %v604
        %v1118 = vmul.f32 %v707, %v605
        %v1119 = vmul.f32 %v707, %v606
        %v1120 = vmul.f32 %v707, %v607
        %v1121 = vmul.f32 %v707, %v608
        %v1122 = vmul.f32 %v707, %v609
        %v1123 = vmul.f32 %v707, %v610
        %v1124 = vmul.f32 %v707, %v611
        %v1125 = vmul.f32 %v707, %v612
        %v1126 = vmul.f32 %v707, %v613
        %v1127 = vmul.f32 %v707, %v614
        %v1128 = vmul.f32 %v707, %v615
        %v1129 = vmul.f32 %v707, %v616
        %v1130 = vmul.f32 %v707, %v617
        %v1131 = vmul.f32 %v707, %v618
        %v1132 = vmul.f32 %v707, %v619
        %v1133 = vmul.f32 %v707, %v620
        %v1134 = vmul.f32 %v707, %v621
        %v1135 = vmul.f32 %v707, %v622
        %v1136 = vmul.f32 %v707, %v623
        %v1137 = vmul.f32 %v707, %v624
        %v1138 = vmul.f32 %v707, %v625
        %v1139 = vmul.f32 %v707, %v626
        %v1140 = vmul.f32 %v707, %v627
        %v1141 = vmul.f32 %v707, %v628
        %v1142 = vmul.f32 %v707, %v629
        %v1143 = vmul.f32 %v707, %v630
        %v1144 = vmul.f32 %v707, %v631
        %v1145 = vmul.f32 %v707, %v632
        %v1146 = vmul.f32 %v707, %v633
        %v1147 = vmul.f32 %v707, %v634
        %v1148 = vmul.f32 %v707, %v635
        %v1149 = vmul.f32 %v707, %v636
        %v1150 = vmul.f32 %v707, %v637
        %v1151 = vmul.f32 %v707, %v638
        %v1152 = vmul.f32 %v707, %v639
        %v1153 = vmul.f32 %v707, %v640
        %v1154 = vmul.f32 %v707, %v641
        %v1155 = vmul.f32 %v707, %v642
        %v1156 = vmul.f32 %v707, %v643
        %v1157 = vmul.f32 %v707, %v644
        %v1158 = vmul.f32 %v707, %v645
        %v1159 = vmul.f32 %v707, %v646
        %v1160 = vmul.f32 %v707, %v647
        %v1161 = vmul.f32 %v707, %v648
        %v1162 = vmul.f32 %v707, %v649
        %v1163 = vmul.f32 %v707, %v650
        %v1164 = vmul.f32 %v707, %v651
        %v1165 = vmul.f32 %v707, %v652
        %v1166 = vmul.f32 %v707, %v653
        %v1167 = vmul.f32 %v707, %v654
        %v1168 = vmul.f32 %v707, %v655
        %v1169 = vmul.f32 %v707, %v656
        %v1170 = vmul.f32 %v707, %v657
        %v1171 = vmul.f32 %v707, %v658
        %v1172 = vmul.f32 %v707, %v659
        %v1173 = vmul.f32 %v707, %v660
        %v1174 = vmul.f32 %v707, %v661
        %v1175 = vmul.f32 %v707, %v662
        %v1176 = vmul.f32 %v707, %v663
        %v1177 = vmul.f32 %v707, %v664
        %v1178 = vmul.f32 %v707, %v665
        %v1179 = vmul.f32 %v707, %v666
        %v1180 = vmul.f32 %v707, %v667
        %v1181 = vmul.f32 %v707, %v668
        %v1182 = vmul.f32 %v707, %v669
        %v1183 = vmul.f32 %v707, %v670
        %v1184 = vmul.f32 %v707, %v671
        %v1185 = vmul.f32 %v707, %v672
        %v1186 = vmul.f32 %v707, %v673
        %v1187 = vmul.f32 %v707, %v674
        %v1188 = vmul.f32 %v707, %v675
        %v1189 = vmul.f32 %v707, %v676
        %v1190 = vmul.f32 %v707, %v677
        %v1191 = vmul.f32 %v707, %v678
        %v1192 = vmul.f32 %v707, %v679
        %v1193 = vmul.f32 %v707, %v680
        %v1194 = vmul.f32 %v707, %v681
        %v1195 = vmul.f32 %v707, %v682
        %v1196 = vmul.f32 %v707, %v683
        %v1197 = vmul.f32 %v707, %v684
        %v1198 = vmul.f32 %v707, %v685
        %v1199 = vmul.f32 %v707, %v686
        %v1200 = vmul.f32 %v707, %v687
        %v1201 = vmul.f32 %v707, %v688
        %v1202 = vmul.f32 %v707, %v689
        %v1203 = vmul.f32 %v707, %v690
        %v1204 = vmul.f32 %v707, %v691
        %v1205 = vmul.f32 %v707, %v692
        %v1206 = vmul.f32 %v707, %v693
        %v1207 = vmul.f32 %v707, %v694
        %v1208 = vmul.f32 %v707, %v695
        %v1209 = vmul.f32 %v707, %v696
        %v1210 = vmul.f32 %v707, %v697
        %v1211 = vmul.f32 %v707, %v698
        %v1212 = vmul.f32 %v707, %v699
        %v1213 = vmul.f32 %v707, %v700
        %v1214 = vmul.f32 %v707, %v701
        %v1215 = vmul.f32 %v707, %v702
        %v1216 = vmul.f32 %v707, %v703
        %v1217 = vmul.f32 %v707, %v704
        %v1218 = vmul.f32 %v707, %v705
        %v1219 = vmul.f32 %v707, %v706
        %s1220 = sld [smem:[#allocation3]]
        %v1221 = vstv %s1220
        %v1222 = vadd.f32 %v708, %v1221
        %v1223 = vadd.f32 %v709, %v1221
        %v1224 = vadd.f32 %v710, %v1221
        %v1225 = vadd.f32 %v711, %v1221
        %v1226 = vadd.f32 %v712, %v1221
        %v1227 = vadd.f32 %v713, %v1221
        %v1228 = vadd.f32 %v714, %v1221
        %v1229 = vadd.f32 %v715, %v1221
        %v1230 = vadd.f32 %v716, %v1221
        %v1231 = vadd.f32 %v717, %v1221
        %v1232 = vadd.f32 %v718, %v1221
        %v1233 = vadd.f32 %v719, %v1221
        %v1234 = vadd.f32 %v720, %v1221
        %v1235 = vadd.f32 %v721, %v1221
        %v1236 = vadd.f32 %v722, %v1221
        %v1237 = vadd.f32 %v723, %v1221
        %v1238 = vadd.f32 %v724, %v1221
        %v1239 = vadd.f32 %v725, %v1221
        %v1240 = vadd.f32 %v726, %v1221
        %v1241 = vadd.f32 %v727, %v1221
        %v1242 = vadd.f32 %v728, %v1221
        %v1243 = vadd.f32 %v729, %v1221
        %v1244 = vadd.f32 %v730, %v1221
        %v1245 = vadd.f32 %v731, %v1221
        %v1246 = vadd.f32 %v732, %v1221
        %v1247 = vadd.f32 %v733, %v1221
        %v1248 = vadd.f32 %v734, %v1221
        %v1249 = vadd.f32 %v735, %v1221
        %v1250 = vadd.f32 %v736, %v1221
        %v1251 = vadd.f32 %v737, %v1221
        %v1252 = vadd.f32 %v738, %v1221
        %v1253 = vadd.f32 %v739, %v1221
        %v1254 = vadd.f32 %v740, %v1221
        %v1255 = vadd.f32 %v741, %v1221
        %v1256 = vadd.f32 %v742, %v1221
        %v1257 = vadd.f32 %v743, %v1221
        %v1258 = vadd.f32 %v744, %v1221
        %v1259 = vadd.f32 %v745, %v1221
        %v1260 = vadd.f32 %v746, %v1221
        %v1261 = vadd.f32 %v747, %v1221
        %v1262 = vadd.f32 %v748, %v1221
        %v1263 = vadd.f32 %v749, %v1221
        %v1264 = vadd.f32 %v750, %v1221
        %v1265 = vadd.f32 %v751, %v1221
        %v1266 = vadd.f32 %v752, %v1221
        %v1267 = vadd.f32 %v753, %v1221
        %v1268 = vadd.f32 %v754, %v1221
        %v1269 = vadd.f32 %v755, %v1221
        %v1270 = vadd.f32 %v756, %v1221
        %v1271 = vadd.f32 %v757, %v1221
        %v1272 = vadd.f32 %v758, %v1221
        %v1273 = vadd.f32 %v759, %v1221
        %v1274 = vadd.f32 %v760, %v1221
        %v1275 = vadd.f32 %v761, %v1221
        %v1276 = vadd.f32 %v762, %v1221
        %v1277 = vadd.f32 %v763, %v1221
        %v1278 = vadd.f32 %v764, %v1221
        %v1279 = vadd.f32 %v765, %v1221
        %v1280 = vadd.f32 %v766, %v1221
        %v1281 = vadd.f32 %v767, %v1221
        %v1282 = vadd.f32 %v768, %v1221
        %v1283 = vadd.f32 %v769, %v1221
        %v1284 = vadd.f32 %v770, %v1221
        %v1285 = vadd.f32 %v771, %v1221
        %v1286 = vadd.f32 %v772, %v1221
        %v1287 = vadd.f32 %v773, %v1221
        %v1288 = vadd.f32 %v774, %v1221
        %v1289 = vadd.f32 %v775, %v1221
        %v1290 = vadd.f32 %v776, %v1221
        %v1291 = vadd.f32 %v777, %v1221
        %v1292 = vadd.f32 %v778, %v1221
        %v1293 = vadd.f32 %v779, %v1221
        %v1294 = vadd.f32 %v780, %v1221
        %v1295 = vadd.f32 %v781, %v1221
        %v1296 = vadd.f32 %v782, %v1221
        %v1297 = vadd.f32 %v783, %v1221
        %v1298 = vadd.f32 %v784, %v1221
        %v1299 = vadd.f32 %v785, %v1221
        %v1300 = vadd.f32 %v786, %v1221
        %v1301 = vadd.f32 %v787, %v1221
        %v1302 = vadd.f32 %v788, %v1221
        %v1303 = vadd.f32 %v789, %v1221
        %v1304 = vadd.f32 %v790, %v1221
        %v1305 = vadd.f32 %v791, %v1221
        %v1306 = vadd.f32 %v792, %v1221
        %v1307 = vadd.f32 %v793, %v1221
        %v1308 = vadd.f32 %v794, %v1221
        %v1309 = vadd.f32 %v795, %v1221
        %v1310 = vadd.f32 %v796, %v1221
        %v1311 = vadd.f32 %v797, %v1221
        %v1312 = vadd.f32 %v798, %v1221
        %v1313 = vadd.f32 %v799, %v1221
        %v1314 = vadd.f32 %v800, %v1221
        %v1315 = vadd.f32 %v801, %v1221
        %v1316 = vadd.f32 %v802, %v1221
        %v1317 = vadd.f32 %v803, %v1221
        %v1318 = vadd.f32 %v804, %v1221
        %v1319 = vadd.f32 %v805, %v1221
        %v1320 = vadd.f32 %v806, %v1221
        %v1321 = vadd.f32 %v807, %v1221
        %v1322 = vadd.f32 %v808, %v1221
        %v1323 = vadd.f32 %v809, %v1221
        %v1324 = vadd.f32 %v810, %v1221
        %v1325 = vadd.f32 %v811, %v1221
        %v1326 = vadd.f32 %v812, %v1221
        %v1327 = vadd.f32 %v813, %v1221
        %v1328 = vadd.f32 %v814, %v1221
        %v1329 = vadd.f32 %v815, %v1221
        %v1330 = vadd.f32 %v816, %v1221
        %v1331 = vadd.f32 %v817, %v1221
        %v1332 = vadd.f32 %v818, %v1221
        %v1333 = vadd.f32 %v819, %v1221
        %v1334 = vadd.f32 %v820, %v1221
        %v1335 = vadd.f32 %v821, %v1221
        %v1336 = vadd.f32 %v822, %v1221
        %v1337 = vadd.f32 %v823, %v1221
        %v1338 = vadd.f32 %v824, %v1221
        %v1339 = vadd.f32 %v825, %v1221
        %v1340 = vadd.f32 %v826, %v1221
        %v1341 = vadd.f32 %v827, %v1221
        %v1342 = vadd.f32 %v828, %v1221
        %v1343 = vadd.f32 %v829, %v1221
        %v1344 = vadd.f32 %v830, %v1221
        %v1345 = vadd.f32 %v831, %v1221
        %v1346 = vadd.f32 %v832, %v1221
        %v1347 = vadd.f32 %v833, %v1221
        %v1348 = vadd.f32 %v834, %v1221
        %v1349 = vadd.f32 %v835, %v1221
        %v1350 = vadd.f32 %v836, %v1221
        %v1351 = vadd.f32 %v837, %v1221
        %v1352 = vadd.f32 %v838, %v1221
        %v1353 = vadd.f32 %v839, %v1221
        %v1354 = vadd.f32 %v840, %v1221
        %v1355 = vadd.f32 %v841, %v1221
        %v1356 = vadd.f32 %v842, %v1221
        %v1357 = vadd.f32 %v843, %v1221
        %v1358 = vadd.f32 %v844, %v1221
        %v1359 = vadd.f32 %v845, %v1221
        %v1360 = vadd.f32 %v846, %v1221
        %v1361 = vadd.f32 %v847, %v1221
        %v1362 = vadd.f32 %v848, %v1221
        %v1363 = vadd.f32 %v849, %v1221
        %v1364 = vadd.f32 %v850, %v1221
        %v1365 = vadd.f32 %v851, %v1221
        %v1366 = vadd.f32 %v852, %v1221
        %v1367 = vadd.f32 %v853, %v1221
        %v1368 = vadd.f32 %v854, %v1221
        %v1369 = vadd.f32 %v855, %v1221
        %v1370 = vadd.f32 %v856, %v1221
        %v1371 = vadd.f32 %v857, %v1221
        %v1372 = vadd.f32 %v858, %v1221
        %v1373 = vadd.f32 %v859, %v1221
        %v1374 = vadd.f32 %v860, %v1221
        %v1375 = vadd.f32 %v861, %v1221
        %v1376 = vadd.f32 %v862, %v1221
        %v1377 = vadd.f32 %v863, %v1221
        %v1378 = vadd.f32 %v864, %v1221
        %v1379 = vadd.f32 %v865, %v1221
        %v1380 = vadd.f32 %v866, %v1221
        %v1381 = vadd.f32 %v867, %v1221
        %v1382 = vadd.f32 %v868, %v1221
        %v1383 = vadd.f32 %v869, %v1221
        %v1384 = vadd.f32 %v870, %v1221
        %v1385 = vadd.f32 %v871, %v1221
        %v1386 = vadd.f32 %v872, %v1221
        %v1387 = vadd.f32 %v873, %v1221
        %v1388 = vadd.f32 %v874, %v1221
        %v1389 = vadd.f32 %v875, %v1221
        %v1390 = vadd.f32 %v876, %v1221
        %v1391 = vadd.f32 %v877, %v1221
        %v1392 = vadd.f32 %v878, %v1221
        %v1393 = vadd.f32 %v879, %v1221
        %v1394 = vadd.f32 %v880, %v1221
        %v1395 = vadd.f32 %v881, %v1221
        %v1396 = vadd.f32 %v882, %v1221
        %v1397 = vadd.f32 %v883, %v1221
        %v1398 = vadd.f32 %v884, %v1221
        %v1399 = vadd.f32 %v885, %v1221
        %v1400 = vadd.f32 %v886, %v1221
        %v1401 = vadd.f32 %v887, %v1221
        %v1402 = vadd.f32 %v888, %v1221
        %v1403 = vadd.f32 %v889, %v1221
        %v1404 = vadd.f32 %v890, %v1221
        %v1405 = vadd.f32 %v891, %v1221
        %v1406 = vadd.f32 %v892, %v1221
        %v1407 = vadd.f32 %v893, %v1221
        %v1408 = vadd.f32 %v894, %v1221
        %v1409 = vadd.f32 %v895, %v1221
        %v1410 = vadd.f32 %v896, %v1221
        %v1411 = vadd.f32 %v897, %v1221
        %v1412 = vadd.f32 %v898, %v1221
        %v1413 = vadd.f32 %v899, %v1221
        %v1414 = vadd.f32 %v900, %v1221
        %v1415 = vadd.f32 %v901, %v1221
        %v1416 = vadd.f32 %v902, %v1221
        %v1417 = vadd.f32 %v903, %v1221
        %v1418 = vadd.f32 %v904, %v1221
        %v1419 = vadd.f32 %v905, %v1221
        %v1420 = vadd.f32 %v906, %v1221
        %v1421 = vadd.f32 %v907, %v1221
        %v1422 = vadd.f32 %v908, %v1221
        %v1423 = vadd.f32 %v909, %v1221
        %v1424 = vadd.f32 %v910, %v1221
        %v1425 = vadd.f32 %v911, %v1221
        %v1426 = vadd.f32 %v912, %v1221
        %v1427 = vadd.f32 %v913, %v1221
        %v1428 = vadd.f32 %v914, %v1221
        %v1429 = vadd.f32 %v915, %v1221
        %v1430 = vadd.f32 %v916, %v1221
        %v1431 = vadd.f32 %v917, %v1221
        %v1432 = vadd.f32 %v918, %v1221
        %v1433 = vadd.f32 %v919, %v1221
        %v1434 = vadd.f32 %v920, %v1221
        %v1435 = vadd.f32 %v921, %v1221
        %v1436 = vadd.f32 %v922, %v1221
        %v1437 = vadd.f32 %v923, %v1221
        %v1438 = vadd.f32 %v924, %v1221
        %v1439 = vadd.f32 %v925, %v1221
        %v1440 = vadd.f32 %v926, %v1221
        %v1441 = vadd.f32 %v927, %v1221
        %v1442 = vadd.f32 %v928, %v1221
        %v1443 = vadd.f32 %v929, %v1221
        %v1444 = vadd.f32 %v930, %v1221
        %v1445 = vadd.f32 %v931, %v1221
        %v1446 = vadd.f32 %v932, %v1221
        %v1447 = vadd.f32 %v933, %v1221
        %v1448 = vadd.f32 %v934, %v1221
        %v1449 = vadd.f32 %v935, %v1221
        %v1450 = vadd.f32 %v936, %v1221
        %v1451 = vadd.f32 %v937, %v1221
        %v1452 = vadd.f32 %v938, %v1221
        %v1453 = vadd.f32 %v939, %v1221
        %v1454 = vadd.f32 %v940, %v1221
        %v1455 = vadd.f32 %v941, %v1221
        %v1456 = vadd.f32 %v942, %v1221
        %v1457 = vadd.f32 %v943, %v1221
        %v1458 = vadd.f32 %v944, %v1221
        %v1459 = vadd.f32 %v945, %v1221
        %v1460 = vadd.f32 %v946, %v1221
        %v1461 = vadd.f32 %v947, %v1221
        %v1462 = vadd.f32 %v948, %v1221
        %v1463 = vadd.f32 %v949, %v1221
        %v1464 = vadd.f32 %v950, %v1221
        %v1465 = vadd.f32 %v951, %v1221
        %v1466 = vadd.f32 %v952, %v1221
        %v1467 = vadd.f32 %v953, %v1221
        %v1468 = vadd.f32 %v954, %v1221
        %v1469 = vadd.f32 %v955, %v1221
        %v1470 = vadd.f32 %v956, %v1221
        %v1471 = vadd.f32 %v957, %v1221
        %v1472 = vadd.f32 %v958, %v1221
        %v1473 = vadd.f32 %v959, %v1221
        %v1474 = vadd.f32 %v960, %v1221
        %v1475 = vadd.f32 %v961, %v1221
        %v1476 = vadd.f32 %v962, %v1221
        %v1477 = vadd.f32 %v963, %v1221
        %v1478 = vadd.f32 %v964, %v1221
        %v1479 = vadd.f32 %v965, %v1221
        %v1480 = vadd.f32 %v966, %v1221
        %v1481 = vadd.f32 %v967, %v1221
        %v1482 = vadd.f32 %v968, %v1221
        %v1483 = vadd.f32 %v969, %v1221
        %v1484 = vadd.f32 %v970, %v1221
        %v1485 = vadd.f32 %v971, %v1221
        %v1486 = vadd.f32 %v972, %v1221
        %v1487 = vadd.f32 %v973, %v1221
        %v1488 = vadd.f32 %v974, %v1221
        %v1489 = vadd.f32 %v975, %v1221
        %v1490 = vadd.f32 %v976, %v1221
        %v1491 = vadd.f32 %v977, %v1221
        %v1492 = vadd.f32 %v978, %v1221
        %v1493 = vadd.f32 %v979, %v1221
        %v1494 = vadd.f32 %v980, %v1221
        %v1495 = vadd.f32 %v981, %v1221
        %v1496 = vadd.f32 %v982, %v1221
        %v1497 = vadd.f32 %v983, %v1221
        %v1498 = vadd.f32 %v984, %v1221
        %v1499 = vadd.f32 %v985, %v1221
        %v1500 = vadd.f32 %v986, %v1221
        %v1501 = vadd.f32 %v987, %v1221
        %v1502 = vadd.f32 %v988, %v1221
        %v1503 = vadd.f32 %v989, %v1221
        %v1504 = vadd.f32 %v990, %v1221
        %v1505 = vadd.f32 %v991, %v1221
        %v1506 = vadd.f32 %v992, %v1221
        %v1507 = vadd.f32 %v993, %v1221
        %v1508 = vadd.f32 %v994, %v1221
        %v1509 = vadd.f32 %v995, %v1221
        %v1510 = vadd.f32 %v996, %v1221
        %v1511 = vadd.f32 %v997, %v1221
        %v1512 = vadd.f32 %v998, %v1221
        %v1513 = vadd.f32 %v999, %v1221
        %v1514 = vadd.f32 %v1000, %v1221
        %v1515 = vadd.f32 %v1001, %v1221
        %v1516 = vadd.f32 %v1002, %v1221
        %v1517 = vadd.f32 %v1003, %v1221
        %v1518 = vadd.f32 %v1004, %v1221
        %v1519 = vadd.f32 %v1005, %v1221
        %v1520 = vadd.f32 %v1006, %v1221
        %v1521 = vadd.f32 %v1007, %v1221
        %v1522 = vadd.f32 %v1008, %v1221
        %v1523 = vadd.f32 %v1009, %v1221
        %v1524 = vadd.f32 %v1010, %v1221
        %v1525 = vadd.f32 %v1011, %v1221
        %v1526 = vadd.f32 %v1012, %v1221
        %v1527 = vadd.f32 %v1013, %v1221
        %v1528 = vadd.f32 %v1014, %v1221
        %v1529 = vadd.f32 %v1015, %v1221
        %v1530 = vadd.f32 %v1016, %v1221
        %v1531 = vadd.f32 %v1017, %v1221
        %v1532 = vadd.f32 %v1018, %v1221
        %v1533 = vadd.f32 %v1019, %v1221
        %v1534 = vadd.f32 %v1020, %v1221
        %v1535 = vadd.f32 %v1021, %v1221
        %v1536 = vadd.f32 %v1022, %v1221
        %v1537 = vadd.f32 %v1023, %v1221
        %v1538 = vadd.f32 %v1024, %v1221
        %v1539 = vadd.f32 %v1025, %v1221
        %v1540 = vadd.f32 %v1026, %v1221
        %v1541 = vadd.f32 %v1027, %v1221
        %v1542 = vadd.f32 %v1028, %v1221
        %v1543 = vadd.f32 %v1029, %v1221
        %v1544 = vadd.f32 %v1030, %v1221
        %v1545 = vadd.f32 %v1031, %v1221
        %v1546 = vadd.f32 %v1032, %v1221
        %v1547 = vadd.f32 %v1033, %v1221
        %v1548 = vadd.f32 %v1034, %v1221
        %v1549 = vadd.f32 %v1035, %v1221
        %v1550 = vadd.f32 %v1036, %v1221
        %v1551 = vadd.f32 %v1037, %v1221
        %v1552 = vadd.f32 %v1038, %v1221
        %v1553 = vadd.f32 %v1039, %v1221
        %v1554 = vadd.f32 %v1040, %v1221
        %v1555 = vadd.f32 %v1041, %v1221
        %v1556 = vadd.f32 %v1042, %v1221
        %v1557 = vadd.f32 %v1043, %v1221
        %v1558 = vadd.f32 %v1044, %v1221
        %v1559 = vadd.f32 %v1045, %v1221
        %v1560 = vadd.f32 %v1046, %v1221
        %v1561 = vadd.f32 %v1047, %v1221
        %v1562 = vadd.f32 %v1048, %v1221
        %v1563 = vadd.f32 %v1049, %v1221
        %v1564 = vadd.f32 %v1050, %v1221
        %v1565 = vadd.f32 %v1051, %v1221
        %v1566 = vadd.f32 %v1052, %v1221
        %v1567 = vadd.f32 %v1053, %v1221
        %v1568 = vadd.f32 %v1054, %v1221
        %v1569 = vadd.f32 %v1055, %v1221
        %v1570 = vadd.f32 %v1056, %v1221
        %v1571 = vadd.f32 %v1057, %v1221
        %v1572 = vadd.f32 %v1058, %v1221
        %v1573 = vadd.f32 %v1059, %v1221
        %v1574 = vadd.f32 %v1060, %v1221
        %v1575 = vadd.f32 %v1061, %v1221
        %v1576 = vadd.f32 %v1062, %v1221
        %v1577 = vadd.f32 %v1063, %v1221
        %v1578 = vadd.f32 %v1064, %v1221
        %v1579 = vadd.f32 %v1065, %v1221
        %v1580 = vadd.f32 %v1066, %v1221
        %v1581 = vadd.f32 %v1067, %v1221
        %v1582 = vadd.f32 %v1068, %v1221
        %v1583 = vadd.f32 %v1069, %v1221
        %v1584 = vadd.f32 %v1070, %v1221
        %v1585 = vadd.f32 %v1071, %v1221
        %v1586 = vadd.f32 %v1072, %v1221
        %v1587 = vadd.f32 %v1073, %v1221
        %v1588 = vadd.f32 %v1074, %v1221
        %v1589 = vadd.f32 %v1075, %v1221
        %v1590 = vadd.f32 %v1076, %v1221
        %v1591 = vadd.f32 %v1077, %v1221
        %v1592 = vadd.f32 %v1078, %v1221
        %v1593 = vadd.f32 %v1079, %v1221
        %v1594 = vadd.f32 %v1080, %v1221
        %v1595 = vadd.f32 %v1081, %v1221
        %v1596 = vadd.f32 %v1082, %v1221
        %v1597 = vadd.f32 %v1083, %v1221
        %v1598 = vadd.f32 %v1084, %v1221
        %v1599 = vadd.f32 %v1085, %v1221
        %v1600 = vadd.f32 %v1086, %v1221
        %v1601 = vadd.f32 %v1087, %v1221
        %v1602 = vadd.f32 %v1088, %v1221
        %v1603 = vadd.f32 %v1089, %v1221
        %v1604 = vadd.f32 %v1090, %v1221
        %v1605 = vadd.f32 %v1091, %v1221
        %v1606 = vadd.f32 %v1092, %v1221
        %v1607 = vadd.f32 %v1093, %v1221
        %v1608 = vadd.f32 %v1094, %v1221
        %v1609 = vadd.f32 %v1095, %v1221
        %v1610 = vadd.f32 %v1096, %v1221
        %v1611 = vadd.f32 %v1097, %v1221
        %v1612 = vadd.f32 %v1098, %v1221
        %v1613 = vadd.f32 %v1099, %v1221
        %v1614 = vadd.f32 %v1100, %v1221
        %v1615 = vadd.f32 %v1101, %v1221
        %v1616 = vadd.f32 %v1102, %v1221
        %v1617 = vadd.f32 %v1103, %v1221
        %v1618 = vadd.f32 %v1104, %v1221
        %v1619 = vadd.f32 %v1105, %v1221
        %v1620 = vadd.f32 %v1106, %v1221
        %v1621 = vadd.f32 %v1107, %v1221
        %v1622 = vadd.f32 %v1108, %v1221
        %v1623 = vadd.f32 %v1109, %v1221
        %v1624 = vadd.f32 %v1110, %v1221
        %v1625 = vadd.f32 %v1111, %v1221
        %v1626 = vadd.f32 %v1112, %v1221
        %v1627 = vadd.f32 %v1113, %v1221
        %v1628 = vadd.f32 %v1114, %v1221
        %v1629 = vadd.f32 %v1115, %v1221
        %v1630 = vadd.f32 %v1116, %v1221
        %v1631 = vadd.f32 %v1117, %v1221
        %v1632 = vadd.f32 %v1118, %v1221
        %v1633 = vadd.f32 %v1119, %v1221
        %v1634 = vadd.f32 %v1120, %v1221
        %v1635 = vadd.f32 %v1121, %v1221
        %v1636 = vadd.f32 %v1122, %v1221
        %v1637 = vadd.f32 %v1123, %v1221
        %v1638 = vadd.f32 %v1124, %v1221
        %v1639 = vadd.f32 %v1125, %v1221
        %v1640 = vadd.f32 %v1126, %v1221
        %v1641 = vadd.f32 %v1127, %v1221
        %v1642 = vadd.f32 %v1128, %v1221
        %v1643 = vadd.f32 %v1129, %v1221
        %v1644 = vadd.f32 %v1130, %v1221
        %v1645 = vadd.f32 %v1131, %v1221
        %v1646 = vadd.f32 %v1132, %v1221
        %v1647 = vadd.f32 %v1133, %v1221
        %v1648 = vadd.f32 %v1134, %v1221
        %v1649 = vadd.f32 %v1135, %v1221
        %v1650 = vadd.f32 %v1136, %v1221
        %v1651 = vadd.f32 %v1137, %v1221
        %v1652 = vadd.f32 %v1138, %v1221
        %v1653 = vadd.f32 %v1139, %v1221
        %v1654 = vadd.f32 %v1140, %v1221
        %v1655 = vadd.f32 %v1141, %v1221
        %v1656 = vadd.f32 %v1142, %v1221
        %v1657 = vadd.f32 %v1143, %v1221
        %v1658 = vadd.f32 %v1144, %v1221
        %v1659 = vadd.f32 %v1145, %v1221
        %v1660 = vadd.f32 %v1146, %v1221
        %v1661 = vadd.f32 %v1147, %v1221
        %v1662 = vadd.f32 %v1148, %v1221
        %v1663 = vadd.f32 %v1149, %v1221
        %v1664 = vadd.f32 %v1150, %v1221
        %v1665 = vadd.f32 %v1151, %v1221
        %v1666 = vadd.f32 %v1152, %v1221
        %v1667 = vadd.f32 %v1153, %v1221
        %v1668 = vadd.f32 %v1154, %v1221
        %v1669 = vadd.f32 %v1155, %v1221
        %v1670 = vadd.f32 %v1156, %v1221
        %v1671 = vadd.f32 %v1157, %v1221
        %v1672 = vadd.f32 %v1158, %v1221
        %v1673 = vadd.f32 %v1159, %v1221
        %v1674 = vadd.f32 %v1160, %v1221
        %v1675 = vadd.f32 %v1161, %v1221
        %v1676 = vadd.f32 %v1162, %v1221
        %v1677 = vadd.f32 %v1163, %v1221
        %v1678 = vadd.f32 %v1164, %v1221
        %v1679 = vadd.f32 %v1165, %v1221
        %v1680 = vadd.f32 %v1166, %v1221
        %v1681 = vadd.f32 %v1167, %v1221
        %v1682 = vadd.f32 %v1168, %v1221
        %v1683 = vadd.f32 %v1169, %v1221
        %v1684 = vadd.f32 %v1170, %v1221
        %v1685 = vadd.f32 %v1171, %v1221
        %v1686 = vadd.f32 %v1172, %v1221
        %v1687 = vadd.f32 %v1173, %v1221
        %v1688 = vadd.f32 %v1174, %v1221
        %v1689 = vadd.f32 %v1175, %v1221
        %v1690 = vadd.f32 %v1176, %v1221
        %v1691 = vadd.f32 %v1177, %v1221
        %v1692 = vadd.f32 %v1178, %v1221
        %v1693 = vadd.f32 %v1179, %v1221
        %v1694 = vadd.f32 %v1180, %v1221
        %v1695 = vadd.f32 %v1181, %v1221
        %v1696 = vadd.f32 %v1182, %v1221
        %v1697 = vadd.f32 %v1183, %v1221
        %v1698 = vadd.f32 %v1184, %v1221
        %v1699 = vadd.f32 %v1185, %v1221
        %v1700 = vadd.f32 %v1186, %v1221
        %v1701 = vadd.f32 %v1187, %v1221
        %v1702 = vadd.f32 %v1188, %v1221
        %v1703 = vadd.f32 %v1189, %v1221
        %v1704 = vadd.f32 %v1190, %v1221
        %v1705 = vadd.f32 %v1191, %v1221
        %v1706 = vadd.f32 %v1192, %v1221
        %v1707 = vadd.f32 %v1193, %v1221
        %v1708 = vadd.f32 %v1194, %v1221
        %v1709 = vadd.f32 %v1195, %v1221
        %v1710 = vadd.f32 %v1196, %v1221
        %v1711 = vadd.f32 %v1197, %v1221
        %v1712 = vadd.f32 %v1198, %v1221
        %v1713 = vadd.f32 %v1199, %v1221
        %v1714 = vadd.f32 %v1200, %v1221
        %v1715 = vadd.f32 %v1201, %v1221
        %v1716 = vadd.f32 %v1202, %v1221
        %v1717 = vadd.f32 %v1203, %v1221
        %v1718 = vadd.f32 %v1204, %v1221
        %v1719 = vadd.f32 %v1205, %v1221
        %v1720 = vadd.f32 %v1206, %v1221
        %v1721 = vadd.f32 %v1207, %v1221
        %v1722 = vadd.f32 %v1208, %v1221
        %v1723 = vadd.f32 %v1209, %v1221
        %v1724 = vadd.f32 %v1210, %v1221
        %v1725 = vadd.f32 %v1211, %v1221
        %v1726 = vadd.f32 %v1212, %v1221
        %v1727 = vadd.f32 %v1213, %v1221
        %v1728 = vadd.f32 %v1214, %v1221
        %v1729 = vadd.f32 %v1215, %v1221
        %v1730 = vadd.f32 %v1216, %v1221
        %v1731 = vadd.f32 %v1217, %v1221
        %v1732 = vadd.f32 %v1218, %v1221
        %v1733 = vadd.f32 %v1219, %v1221
        %1734 = vst [vmem:[%s191] sm:$0xff] %v1222
        %1735 = vst [vmem:[%s191 + $0x8] sm:$0xff] %v1223
        %1736 = vst [vmem:[%s191 + $0x10] sm:$0xff] %v1224
        %1737 = vst [vmem:[%s191 + $0x18] sm:$0xff] %v1225
        %1738 = vst [vmem:[%s191 + $0x20] sm:$0xff] %v1226
        %1739 = vst [vmem:[%s191 + $0x28] sm:$0xff] %v1227
        %1740 = vst [vmem:[%s191 + $0x30] sm:$0xff] %v1228
        %1741 = vst [vmem:[%s191 + $0x38] sm:$0xff] %v1229
        %1742 = vst [vmem:[%s191 + $0x40] sm:$0xff] %v1230
        %1743 = vst [vmem:[%s191 + $0x48] sm:$0xff] %v1231
        %1744 = vst [vmem:[%s191 + $0x50] sm:$0xff] %v1232
        %1745 = vst [vmem:[%s191 + $0x58] sm:$0xff] %v1233
        %1746 = vst [vmem:[%s191 + $0x60] sm:$0xff] %v1234
        %1747 = vst [vmem:[%s191 + $0x68] sm:$0xff] %v1235
        %1748 = vst [vmem:[%s191 + $0x70] sm:$0xff] %v1236
        %1749 = vst [vmem:[%s191 + $0x78] sm:$0xff] %v1237
        %1750 = vst [vmem:[%s191 + $0x80] sm:$0xff] %v1238
        %1751 = vst [vmem:[%s191 + $0x88] sm:$0xff] %v1239
        %1752 = vst [vmem:[%s191 + $0x90] sm:$0xff] %v1240
        %1753 = vst [vmem:[%s191 + $0x98] sm:$0xff] %v1241
        %1754 = vst [vmem:[%s191 + $0xa0] sm:$0xff] %v1242
        %1755 = vst [vmem:[%s191 + $0xa8] sm:$0xff] %v1243
        %1756 = vst [vmem:[%s191 + $0xb0] sm:$0xff] %v1244
        %1757 = vst [vmem:[%s191 + $0xb8] sm:$0xff] %v1245
        %1758 = vst [vmem:[%s191 + $0xc0] sm:$0xff] %v1246
        %1759 = vst [vmem:[%s191 + $0xc8] sm:$0xff] %v1247
        %1760 = vst [vmem:[%s191 + $0xd0] sm:$0xff] %v1248
        %1761 = vst [vmem:[%s191 + $0xd8] sm:$0xff] %v1249
        %1762 = vst [vmem:[%s191 + $0xe0] sm:$0xff] %v1250
        %1763 = vst [vmem:[%s191 + $0xe8] sm:$0xff] %v1251
        %1764 = vst [vmem:[%s191 + $0xf0] sm:$0xff] %v1252
        %1765 = vst [vmem:[%s191 + $0xf8] sm:$0xff] %v1253
        %1766 = vst [vmem:[%s191 + $0x100] sm:$0xff] %v1254
        %1767 = vst [vmem:[%s191 + $0x108] sm:$0xff] %v1255
        %1768 = vst [vmem:[%s191 + $0x110] sm:$0xff] %v1256
        %1769 = vst [vmem:[%s191 + $0x118] sm:$0xff] %v1257
        %1770 = vst [vmem:[%s191 + $0x120] sm:$0xff] %v1258
        %1771 = vst [vmem:[%s191 + $0x128] sm:$0xff] %v1259
        %1772 = vst [vmem:[%s191 + $0x130] sm:$0xff] %v1260
        %1773 = vst [vmem:[%s191 + $0x138] sm:$0xff] %v1261
        %1774 = vst [vmem:[%s191 + $0x140] sm:$0xff] %v1262
        %1775 = vst [vmem:[%s191 + $0x148] sm:$0xff] %v1263
        %1776 = vst [vmem:[%s191 + $0x150] sm:$0xff] %v1264
        %1777 = vst [vmem:[%s191 + $0x158] sm:$0xff] %v1265
        %1778 = vst [vmem:[%s191 + $0x160] sm:$0xff] %v1266
        %1779 = vst [vmem:[%s191 + $0x168] sm:$0xff] %v1267
        %1780 = vst [vmem:[%s191 + $0x170] sm:$0xff] %v1268
        %1781 = vst [vmem:[%s191 + $0x178] sm:$0xff] %v1269
        %1782 = vst [vmem:[%s191 + $0x180] sm:$0xff] %v1270
        %1783 = vst [vmem:[%s191 + $0x188] sm:$0xff] %v1271
        %1784 = vst [vmem:[%s191 + $0x190] sm:$0xff] %v1272
        %1785 = vst [vmem:[%s191 + $0x198] sm:$0xff] %v1273
        %1786 = vst [vmem:[%s191 + $0x1a0] sm:$0xff] %v1274
        %1787 = vst [vmem:[%s191 + $0x1a8] sm:$0xff] %v1275
        %1788 = vst [vmem:[%s191 + $0x1b0] sm:$0xff] %v1276
        %1789 = vst [vmem:[%s191 + $0x1b8] sm:$0xff] %v1277
        %1790 = vst [vmem:[%s191 + $0x1c0] sm:$0xff] %v1278
        %1791 = vst [vmem:[%s191 + $0x1c8] sm:$0xff] %v1279
        %1792 = vst [vmem:[%s191 + $0x1d0] sm:$0xff] %v1280
        %1793 = vst [vmem:[%s191 + $0x1d8] sm:$0xff] %v1281
        %1794 = vst [vmem:[%s191 + $0x1e0] sm:$0xff] %v1282
        %1795 = vst [vmem:[%s191 + $0x1e8] sm:$0xff] %v1283
        %1796 = vst [vmem:[%s191 + $0x1f0] sm:$0xff] %v1284
        %1797 = vst [vmem:[%s191 + $0x1f8] sm:$0xff] %v1285
        %1798 = vst [vmem:[%s191 + $0x200] sm:$0xff] %v1286
        %1799 = vst [vmem:[%s191 + $0x208] sm:$0xff] %v1287
        %1800 = vst [vmem:[%s191 + $0x210] sm:$0xff] %v1288
        %1801 = vst [vmem:[%s191 + $0x218] sm:$0xff] %v1289
        %1802 = vst [vmem:[%s191 + $0x220] sm:$0xff] %v1290
        %1803 = vst [vmem:[%s191 + $0x228] sm:$0xff] %v1291
        %1804 = vst [vmem:[%s191 + $0x230] sm:$0xff] %v1292
        %1805 = vst [vmem:[%s191 + $0x238] sm:$0xff] %v1293
        %1806 = vst [vmem:[%s191 + $0x240] sm:$0xff] %v1294
        %1807 = vst [vmem:[%s191 + $0x248] sm:$0xff] %v1295
        %1808 = vst [vmem:[%s191 + $0x250] sm:$0xff] %v1296
        %1809 = vst [vmem:[%s191 + $0x258] sm:$0xff] %v1297
        %1810 = vst [vmem:[%s191 + $0x260] sm:$0xff] %v1298
        %1811 = vst [vmem:[%s191 + $0x268] sm:$0xff] %v1299
        %1812 = vst [vmem:[%s191 + $0x270] sm:$0xff] %v1300
        %1813 = vst [vmem:[%s191 + $0x278] sm:$0xff] %v1301
        %1814 = vst [vmem:[%s191 + $0x280] sm:$0xff] %v1302
        %1815 = vst [vmem:[%s191 + $0x288] sm:$0xff] %v1303
        %1816 = vst [vmem:[%s191 + $0x290] sm:$0xff] %v1304
        %1817 = vst [vmem:[%s191 + $0x298] sm:$0xff] %v1305
        %1818 = vst [vmem:[%s191 + $0x2a0] sm:$0xff] %v1306
        %1819 = vst [vmem:[%s191 + $0x2a8] sm:$0xff] %v1307
        %1820 = vst [vmem:[%s191 + $0x2b0] sm:$0xff] %v1308
        %1821 = vst [vmem:[%s191 + $0x2b8] sm:$0xff] %v1309
        %1822 = vst [vmem:[%s191 + $0x2c0] sm:$0xff] %v1310
        %1823 = vst [vmem:[%s191 + $0x2c8] sm:$0xff] %v1311
        %1824 = vst [vmem:[%s191 + $0x2d0] sm:$0xff] %v1312
        %1825 = vst [vmem:[%s191 + $0x2d8] sm:$0xff] %v1313
        %1826 = vst [vmem:[%s191 + $0x2e0] sm:$0xff] %v1314
        %1827 = vst [vmem:[%s191 + $0x2e8] sm:$0xff] %v1315
        %1828 = vst [vmem:[%s191 + $0x2f0] sm:$0xff] %v1316
        %1829 = vst [vmem:[%s191 + $0x2f8] sm:$0xff] %v1317
        %1830 = vst [vmem:[%s191 + $0x300] sm:$0xff] %v1318
        %1831 = vst [vmem:[%s191 + $0x308] sm:$0xff] %v1319
        %1832 = vst [vmem:[%s191 + $0x310] sm:$0xff] %v1320
        %1833 = vst [vmem:[%s191 + $0x318] sm:$0xff] %v1321
        %1834 = vst [vmem:[%s191 + $0x320] sm:$0xff] %v1322
        %1835 = vst [vmem:[%s191 + $0x328] sm:$0xff] %v1323
        %1836 = vst [vmem:[%s191 + $0x330] sm:$0xff] %v1324
        %1837 = vst [vmem:[%s191 + $0x338] sm:$0xff] %v1325
        %1838 = vst [vmem:[%s191 + $0x340] sm:$0xff] %v1326
        %1839 = vst [vmem:[%s191 + $0x348] sm:$0xff] %v1327
        %1840 = vst [vmem:[%s191 + $0x350] sm:$0xff] %v1328
        %1841 = vst [vmem:[%s191 + $0x358] sm:$0xff] %v1329
        %1842 = vst [vmem:[%s191 + $0x360] sm:$0xff] %v1330
        %1843 = vst [vmem:[%s191 + $0x368] sm:$0xff] %v1331
        %1844 = vst [vmem:[%s191 + $0x370] sm:$0xff] %v1332
        %1845 = vst [vmem:[%s191 + $0x378] sm:$0xff] %v1333
        %1846 = vst [vmem:[%s191 + $0x380] sm:$0xff] %v1334
        %1847 = vst [vmem:[%s191 + $0x388] sm:$0xff] %v1335
        %1848 = vst [vmem:[%s191 + $0x390] sm:$0xff] %v1336
        %1849 = vst [vmem:[%s191 + $0x398] sm:$0xff] %v1337
        %1850 = vst [vmem:[%s191 + $0x3a0] sm:$0xff] %v1338
        %1851 = vst [vmem:[%s191 + $0x3a8] sm:$0xff] %v1339
        %1852 = vst [vmem:[%s191 + $0x3b0] sm:$0xff] %v1340
        %1853 = vst [vmem:[%s191 + $0x3b8] sm:$0xff] %v1341
        %1854 = vst [vmem:[%s191 + $0x3c0] sm:$0xff] %v1342
        %1855 = vst [vmem:[%s191 + $0x3c8] sm:$0xff] %v1343
        %1856 = vst [vmem:[%s191 + $0x3d0] sm:$0xff] %v1344
        %1857 = vst [vmem:[%s191 + $0x3d8] sm:$0xff] %v1345
        %1858 = vst [vmem:[%s191 + $0x3e0] sm:$0xff] %v1346
        %1859 = vst [vmem:[%s191 + $0x3e8] sm:$0xff] %v1347
        %1860 = vst [vmem:[%s191 + $0x3f0] sm:$0xff] %v1348
        %1861 = vst [vmem:[%s191 + $0x3f8] sm:$0xff] %v1349
        %1862 = vst [vmem:[%s191 + $0x400] sm:$0xff] %v1350
        %1863 = vst [vmem:[%s191 + $0x408] sm:$0xff] %v1351
        %1864 = vst [vmem:[%s191 + $0x410] sm:$0xff] %v1352
        %1865 = vst [vmem:[%s191 + $0x418] sm:$0xff] %v1353
        %1866 = vst [vmem:[%s191 + $0x420] sm:$0xff] %v1354
        %1867 = vst [vmem:[%s191 + $0x428] sm:$0xff] %v1355
        %1868 = vst [vmem:[%s191 + $0x430] sm:$0xff] %v1356
        %1869 = vst [vmem:[%s191 + $0x438] sm:$0xff] %v1357
        %1870 = vst [vmem:[%s191 + $0x440] sm:$0xff] %v1358
        %1871 = vst [vmem:[%s191 + $0x448] sm:$0xff] %v1359
        %1872 = vst [vmem:[%s191 + $0x450] sm:$0xff] %v1360
        %1873 = vst [vmem:[%s191 + $0x458] sm:$0xff] %v1361
        %1874 = vst [vmem:[%s191 + $0x460] sm:$0xff] %v1362
        %1875 = vst [vmem:[%s191 + $0x468] sm:$0xff] %v1363
        %1876 = vst [vmem:[%s191 + $0x470] sm:$0xff] %v1364
        %1877 = vst [vmem:[%s191 + $0x478] sm:$0xff] %v1365
        %1878 = vst [vmem:[%s191 + $0x480] sm:$0xff] %v1366
        %1879 = vst [vmem:[%s191 + $0x488] sm:$0xff] %v1367
        %1880 = vst [vmem:[%s191 + $0x490] sm:$0xff] %v1368
        %1881 = vst [vmem:[%s191 + $0x498] sm:$0xff] %v1369
        %1882 = vst [vmem:[%s191 + $0x4a0] sm:$0xff] %v1370
        %1883 = vst [vmem:[%s191 + $0x4a8] sm:$0xff] %v1371
        %1884 = vst [vmem:[%s191 + $0x4b0] sm:$0xff] %v1372
        %1885 = vst [vmem:[%s191 + $0x4b8] sm:$0xff] %v1373
        %1886 = vst [vmem:[%s191 + $0x4c0] sm:$0xff] %v1374
        %1887 = vst [vmem:[%s191 + $0x4c8] sm:$0xff] %v1375
        %1888 = vst [vmem:[%s191 + $0x4d0] sm:$0xff] %v1376
        %1889 = vst [vmem:[%s191 + $0x4d8] sm:$0xff] %v1377
        %1890 = vst [vmem:[%s191 + $0x4e0] sm:$0xff] %v1378
        %1891 = vst [vmem:[%s191 + $0x4e8] sm:$0xff] %v1379
        %1892 = vst [vmem:[%s191 + $0x4f0] sm:$0xff] %v1380
        %1893 = vst [vmem:[%s191 + $0x4f8] sm:$0xff] %v1381
        %1894 = vst [vmem:[%s191 + $0x500] sm:$0xff] %v1382
        %1895 = vst [vmem:[%s191 + $0x508] sm:$0xff] %v1383
        %1896 = vst [vmem:[%s191 + $0x510] sm:$0xff] %v1384
        %1897 = vst [vmem:[%s191 + $0x518] sm:$0xff] %v1385
        %1898 = vst [vmem:[%s191 + $0x520] sm:$0xff] %v1386
        %1899 = vst [vmem:[%s191 + $0x528] sm:$0xff] %v1387
        %1900 = vst [vmem:[%s191 + $0x530] sm:$0xff] %v1388
        %1901 = vst [vmem:[%s191 + $0x538] sm:$0xff] %v1389
        %1902 = vst [vmem:[%s191 + $0x540] sm:$0xff] %v1390
        %1903 = vst [vmem:[%s191 + $0x548] sm:$0xff] %v1391
        %1904 = vst [vmem:[%s191 + $0x550] sm:$0xff] %v1392
        %1905 = vst [vmem:[%s191 + $0x558] sm:$0xff] %v1393
        %1906 = vst [vmem:[%s191 + $0x560] sm:$0xff] %v1394
        %1907 = vst [vmem:[%s191 + $0x568] sm:$0xff] %v1395
        %1908 = vst [vmem:[%s191 + $0x570] sm:$0xff] %v1396
        %1909 = vst [vmem:[%s191 + $0x578] sm:$0xff] %v1397
        %1910 = vst [vmem:[%s191 + $0x580] sm:$0xff] %v1398
        %1911 = vst [vmem:[%s191 + $0x588] sm:$0xff] %v1399
        %1912 = vst [vmem:[%s191 + $0x590] sm:$0xff] %v1400
        %1913 = vst [vmem:[%s191 + $0x598] sm:$0xff] %v1401
        %1914 = vst [vmem:[%s191 + $0x5a0] sm:$0xff] %v1402
        %1915 = vst [vmem:[%s191 + $0x5a8] sm:$0xff] %v1403
        %1916 = vst [vmem:[%s191 + $0x5b0] sm:$0xff] %v1404
        %1917 = vst [vmem:[%s191 + $0x5b8] sm:$0xff] %v1405
        %1918 = vst [vmem:[%s191 + $0x5c0] sm:$0xff] %v1406
        %1919 = vst [vmem:[%s191 + $0x5c8] sm:$0xff] %v1407
        %1920 = vst [vmem:[%s191 + $0x5d0] sm:$0xff] %v1408
        %1921 = vst [vmem:[%s191 + $0x5d8] sm:$0xff] %v1409
        %1922 = vst [vmem:[%s191 + $0x5e0] sm:$0xff] %v1410
        %1923 = vst [vmem:[%s191 + $0x5e8] sm:$0xff] %v1411
        %1924 = vst [vmem:[%s191 + $0x5f0] sm:$0xff] %v1412
        %1925 = vst [vmem:[%s191 + $0x5f8] sm:$0xff] %v1413
        %1926 = vst [vmem:[%s191 + $0x600] sm:$0xff] %v1414
        %1927 = vst [vmem:[%s191 + $0x608] sm:$0xff] %v1415
        %1928 = vst [vmem:[%s191 + $0x610] sm:$0xff] %v1416
        %1929 = vst [vmem:[%s191 + $0x618] sm:$0xff] %v1417
        %1930 = vst [vmem:[%s191 + $0x620] sm:$0xff] %v1418
        %1931 = vst [vmem:[%s191 + $0x628] sm:$0xff] %v1419
        %1932 = vst [vmem:[%s191 + $0x630] sm:$0xff] %v1420
        %1933 = vst [vmem:[%s191 + $0x638] sm:$0xff] %v1421
        %1934 = vst [vmem:[%s191 + $0x640] sm:$0xff] %v1422
        %1935 = vst [vmem:[%s191 + $0x648] sm:$0xff] %v1423
        %1936 = vst [vmem:[%s191 + $0x650] sm:$0xff] %v1424
        %1937 = vst [vmem:[%s191 + $0x658] sm:$0xff] %v1425
        %1938 = vst [vmem:[%s191 + $0x660] sm:$0xff] %v1426
        %1939 = vst [vmem:[%s191 + $0x668] sm:$0xff] %v1427
        %1940 = vst [vmem:[%s191 + $0x670] sm:$0xff] %v1428
        %1941 = vst [vmem:[%s191 + $0x678] sm:$0xff] %v1429
        %1942 = vst [vmem:[%s191 + $0x680] sm:$0xff] %v1430
        %1943 = vst [vmem:[%s191 + $0x688] sm:$0xff] %v1431
        %1944 = vst [vmem:[%s191 + $0x690] sm:$0xff] %v1432
        %1945 = vst [vmem:[%s191 + $0x698] sm:$0xff] %v1433
        %1946 = vst [vmem:[%s191 + $0x6a0] sm:$0xff] %v1434
        %1947 = vst [vmem:[%s191 + $0x6a8] sm:$0xff] %v1435
        %1948 = vst [vmem:[%s191 + $0x6b0] sm:$0xff] %v1436
        %1949 = vst [vmem:[%s191 + $0x6b8] sm:$0xff] %v1437
        %1950 = vst [vmem:[%s191 + $0x6c0] sm:$0xff] %v1438
        %1951 = vst [vmem:[%s191 + $0x6c8] sm:$0xff] %v1439
        %1952 = vst [vmem:[%s191 + $0x6d0] sm:$0xff] %v1440
        %1953 = vst [vmem:[%s191 + $0x6d8] sm:$0xff] %v1441
        %1954 = vst [vmem:[%s191 + $0x6e0] sm:$0xff] %v1442
        %1955 = vst [vmem:[%s191 + $0x6e8] sm:$0xff] %v1443
        %1956 = vst [vmem:[%s191 + $0x6f0] sm:$0xff] %v1444
        %1957 = vst [vmem:[%s191 + $0x6f8] sm:$0xff] %v1445
        %1958 = vst [vmem:[%s191 + $0x700] sm:$0xff] %v1446
        %1959 = vst [vmem:[%s191 + $0x708] sm:$0xff] %v1447
        %1960 = vst [vmem:[%s191 + $0x710] sm:$0xff] %v1448
        %1961 = vst [vmem:[%s191 + $0x718] sm:$0xff] %v1449
        %1962 = vst [vmem:[%s191 + $0x720] sm:$0xff] %v1450
        %1963 = vst [vmem:[%s191 + $0x728] sm:$0xff] %v1451
        %1964 = vst [vmem:[%s191 + $0x730] sm:$0xff] %v1452
        %1965 = vst [vmem:[%s191 + $0x738] sm:$0xff] %v1453
        %1966 = vst [vmem:[%s191 + $0x740] sm:$0xff] %v1454
        %1967 = vst [vmem:[%s191 + $0x748] sm:$0xff] %v1455
        %1968 = vst [vmem:[%s191 + $0x750] sm:$0xff] %v1456
        %1969 = vst [vmem:[%s191 + $0x758] sm:$0xff] %v1457
        %1970 = vst [vmem:[%s191 + $0x760] sm:$0xff] %v1458
        %1971 = vst [vmem:[%s191 + $0x768] sm:$0xff] %v1459
        %1972 = vst [vmem:[%s191 + $0x770] sm:$0xff] %v1460
        %1973 = vst [vmem:[%s191 + $0x778] sm:$0xff] %v1461
        %1974 = vst [vmem:[%s191 + $0x780] sm:$0xff] %v1462
        %1975 = vst [vmem:[%s191 + $0x788] sm:$0xff] %v1463
        %1976 = vst [vmem:[%s191 + $0x790] sm:$0xff] %v1464
        %1977 = vst [vmem:[%s191 + $0x798] sm:$0xff] %v1465
        %1978 = vst [vmem:[%s191 + $0x7a0] sm:$0xff] %v1466
        %1979 = vst [vmem:[%s191 + $0x7a8] sm:$0xff] %v1467
        %1980 = vst [vmem:[%s191 + $0x7b0] sm:$0xff] %v1468
        %1981 = vst [vmem:[%s191 + $0x7b8] sm:$0xff] %v1469
        %1982 = vst [vmem:[%s191 + $0x7c0] sm:$0xff] %v1470
        %1983 = vst [vmem:[%s191 + $0x7c8] sm:$0xff] %v1471
        %1984 = vst [vmem:[%s191 + $0x7d0] sm:$0xff] %v1472
        %1985 = vst [vmem:[%s191 + $0x7d8] sm:$0xff] %v1473
        %1986 = vst [vmem:[%s191 + $0x7e0] sm:$0xff] %v1474
        %1987 = vst [vmem:[%s191 + $0x7e8] sm:$0xff] %v1475
        %1988 = vst [vmem:[%s191 + $0x7f0] sm:$0xff] %v1476
        %1989 = vst [vmem:[%s191 + $0x7f8] sm:$0xff] %v1477
        %1990 = vst [vmem:[%s191 + $0x800] sm:$0xff] %v1478
        %1991 = vst [vmem:[%s191 + $0x808] sm:$0xff] %v1479
        %1992 = vst [vmem:[%s191 + $0x810] sm:$0xff] %v1480
        %1993 = vst [vmem:[%s191 + $0x818] sm:$0xff] %v1481
        %1994 = vst [vmem:[%s191 + $0x820] sm:$0xff] %v1482
        %1995 = vst [vmem:[%s191 + $0x828] sm:$0xff] %v1483
        %1996 = vst [vmem:[%s191 + $0x830] sm:$0xff] %v1484
        %1997 = vst [vmem:[%s191 + $0x838] sm:$0xff] %v1485
        %1998 = vst [vmem:[%s191 + $0x840] sm:$0xff] %v1486
        %1999 = vst [vmem:[%s191 + $0x848] sm:$0xff] %v1487
        %2000 = vst [vmem:[%s191 + $0x850] sm:$0xff] %v1488
        %2001 = vst [vmem:[%s191 + $0x858] sm:$0xff] %v1489
        %2002 = vst [vmem:[%s191 + $0x860] sm:$0xff] %v1490
        %2003 = vst [vmem:[%s191 + $0x868] sm:$0xff] %v1491
        %2004 = vst [vmem:[%s191 + $0x870] sm:$0xff] %v1492
        %2005 = vst [vmem:[%s191 + $0x878] sm:$0xff] %v1493
        %2006 = vst [vmem:[%s191 + $0x880] sm:$0xff] %v1494
        %2007 = vst [vmem:[%s191 + $0x888] sm:$0xff] %v1495
        %2008 = vst [vmem:[%s191 + $0x890] sm:$0xff] %v1496
        %2009 = vst [vmem:[%s191 + $0x898] sm:$0xff] %v1497
        %2010 = vst [vmem:[%s191 + $0x8a0] sm:$0xff] %v1498
        %2011 = vst [vmem:[%s191 + $0x8a8] sm:$0xff] %v1499
        %2012 = vst [vmem:[%s191 + $0x8b0] sm:$0xff] %v1500
        %2013 = vst [vmem:[%s191 + $0x8b8] sm:$0xff] %v1501
        %2014 = vst [vmem:[%s191 + $0x8c0] sm:$0xff] %v1502
        %2015 = vst [vmem:[%s191 + $0x8c8] sm:$0xff] %v1503
        %2016 = vst [vmem:[%s191 + $0x8d0] sm:$0xff] %v1504
        %2017 = vst [vmem:[%s191 + $0x8d8] sm:$0xff] %v1505
        %2018 = vst [vmem:[%s191 + $0x8e0] sm:$0xff] %v1506
        %2019 = vst [vmem:[%s191 + $0x8e8] sm:$0xff] %v1507
        %2020 = vst [vmem:[%s191 + $0x8f0] sm:$0xff] %v1508
        %2021 = vst [vmem:[%s191 + $0x8f8] sm:$0xff] %v1509
        %2022 = vst [vmem:[%s191 + $0x900] sm:$0xff] %v1510
        %2023 = vst [vmem:[%s191 + $0x908] sm:$0xff] %v1511
        %2024 = vst [vmem:[%s191 + $0x910] sm:$0xff] %v1512
        %2025 = vst [vmem:[%s191 + $0x918] sm:$0xff] %v1513
        %2026 = vst [vmem:[%s191 + $0x920] sm:$0xff] %v1514
        %2027 = vst [vmem:[%s191 + $0x928] sm:$0xff] %v1515
        %2028 = vst [vmem:[%s191 + $0x930] sm:$0xff] %v1516
        %2029 = vst [vmem:[%s191 + $0x938] sm:$0xff] %v1517
        %2030 = vst [vmem:[%s191 + $0x940] sm:$0xff] %v1518
        %2031 = vst [vmem:[%s191 + $0x948] sm:$0xff] %v1519
        %2032 = vst [vmem:[%s191 + $0x950] sm:$0xff] %v1520
        %2033 = vst [vmem:[%s191 + $0x958] sm:$0xff] %v1521
        %2034 = vst [vmem:[%s191 + $0x960] sm:$0xff] %v1522
        %2035 = vst [vmem:[%s191 + $0x968] sm:$0xff] %v1523
        %2036 = vst [vmem:[%s191 + $0x970] sm:$0xff] %v1524
        %2037 = vst [vmem:[%s191 + $0x978] sm:$0xff] %v1525
        %2038 = vst [vmem:[%s191 + $0x980] sm:$0xff] %v1526
        %2039 = vst [vmem:[%s191 + $0x988] sm:$0xff] %v1527
        %2040 = vst [vmem:[%s191 + $0x990] sm:$0xff] %v1528
        %2041 = vst [vmem:[%s191 + $0x998] sm:$0xff] %v1529
        %2042 = vst [vmem:[%s191 + $0x9a0] sm:$0xff] %v1530
        %2043 = vst [vmem:[%s191 + $0x9a8] sm:$0xff] %v1531
        %2044 = vst [vmem:[%s191 + $0x9b0] sm:$0xff] %v1532
        %2045 = vst [vmem:[%s191 + $0x9b8] sm:$0xff] %v1533
        %2046 = vst [vmem:[%s191 + $0x9c0] sm:$0xff] %v1534
        %2047 = vst [vmem:[%s191 + $0x9c8] sm:$0xff] %v1535
        %2048 = vst [vmem:[%s191 + $0x9d0] sm:$0xff] %v1536
        %2049 = vst [vmem:[%s191 + $0x9d8] sm:$0xff] %v1537
        %2050 = vst [vmem:[%s191 + $0x9e0] sm:$0xff] %v1538
        %2051 = vst [vmem:[%s191 + $0x9e8] sm:$0xff] %v1539
        %2052 = vst [vmem:[%s191 + $0x9f0] sm:$0xff] %v1540
        %2053 = vst [vmem:[%s191 + $0x9f8] sm:$0xff] %v1541
        %2054 = vst [vmem:[%s191 + $0xa00] sm:$0xff] %v1542
        %2055 = vst [vmem:[%s191 + $0xa08] sm:$0xff] %v1543
        %2056 = vst [vmem:[%s191 + $0xa10] sm:$0xff] %v1544
        %2057 = vst [vmem:[%s191 + $0xa18] sm:$0xff] %v1545
        %2058 = vst [vmem:[%s191 + $0xa20] sm:$0xff] %v1546
        %2059 = vst [vmem:[%s191 + $0xa28] sm:$0xff] %v1547
        %2060 = vst [vmem:[%s191 + $0xa30] sm:$0xff] %v1548
        %2061 = vst [vmem:[%s191 + $0xa38] sm:$0xff] %v1549
        %2062 = vst [vmem:[%s191 + $0xa40] sm:$0xff] %v1550
        %2063 = vst [vmem:[%s191 + $0xa48] sm:$0xff] %v1551
        %2064 = vst [vmem:[%s191 + $0xa50] sm:$0xff] %v1552
        %2065 = vst [vmem:[%s191 + $0xa58] sm:$0xff] %v1553
        %2066 = vst [vmem:[%s191 + $0xa60] sm:$0xff] %v1554
        %2067 = vst [vmem:[%s191 + $0xa68] sm:$0xff] %v1555
        %2068 = vst [vmem:[%s191 + $0xa70] sm:$0xff] %v1556
        %2069 = vst [vmem:[%s191 + $0xa78] sm:$0xff] %v1557
        %2070 = vst [vmem:[%s191 + $0xa80] sm:$0xff] %v1558
        %2071 = vst [vmem:[%s191 + $0xa88] sm:$0xff] %v1559
        %2072 = vst [vmem:[%s191 + $0xa90] sm:$0xff] %v1560
        %2073 = vst [vmem:[%s191 + $0xa98] sm:$0xff] %v1561
        %2074 = vst [vmem:[%s191 + $0xaa0] sm:$0xff] %v1562
        %2075 = vst [vmem:[%s191 + $0xaa8] sm:$0xff] %v1563
        %2076 = vst [vmem:[%s191 + $0xab0] sm:$0xff] %v1564
        %2077 = vst [vmem:[%s191 + $0xab8] sm:$0xff] %v1565
        %2078 = vst [vmem:[%s191 + $0xac0] sm:$0xff] %v1566
        %2079 = vst [vmem:[%s191 + $0xac8] sm:$0xff] %v1567
        %2080 = vst [vmem:[%s191 + $0xad0] sm:$0xff] %v1568
        %2081 = vst [vmem:[%s191 + $0xad8] sm:$0xff] %v1569
        %2082 = vst [vmem:[%s191 + $0xae0] sm:$0xff] %v1570
        %2083 = vst [vmem:[%s191 + $0xae8] sm:$0xff] %v1571
        %2084 = vst [vmem:[%s191 + $0xaf0] sm:$0xff] %v1572
        %2085 = vst [vmem:[%s191 + $0xaf8] sm:$0xff] %v1573
        %2086 = vst [vmem:[%s191 + $0xb00] sm:$0xff] %v1574
        %2087 = vst [vmem:[%s191 + $0xb08] sm:$0xff] %v1575
        %2088 = vst [vmem:[%s191 + $0xb10] sm:$0xff] %v1576
        %2089 = vst [vmem:[%s191 + $0xb18] sm:$0xff] %v1577
        %2090 = vst [vmem:[%s191 + $0xb20] sm:$0xff] %v1578
        %2091 = vst [vmem:[%s191 + $0xb28] sm:$0xff] %v1579
        %2092 = vst [vmem:[%s191 + $0xb30] sm:$0xff] %v1580
        %2093 = vst [vmem:[%s191 + $0xb38] sm:$0xff] %v1581
        %2094 = vst [vmem:[%s191 + $0xb40] sm:$0xff] %v1582
        %2095 = vst [vmem:[%s191 + $0xb48] sm:$0xff] %v1583
        %2096 = vst [vmem:[%s191 + $0xb50] sm:$0xff] %v1584
        %2097 = vst [vmem:[%s191 + $0xb58] sm:$0xff] %v1585
        %2098 = vst [vmem:[%s191 + $0xb60] sm:$0xff] %v1586
        %2099 = vst [vmem:[%s191 + $0xb68] sm:$0xff] %v1587
        %2100 = vst [vmem:[%s191 + $0xb70] sm:$0xff] %v1588
        %2101 = vst [vmem:[%s191 + $0xb78] sm:$0xff] %v1589
        %2102 = vst [vmem:[%s191 + $0xb80] sm:$0xff] %v1590
        %2103 = vst [vmem:[%s191 + $0xb88] sm:$0xff] %v1591
        %2104 = vst [vmem:[%s191 + $0xb90] sm:$0xff] %v1592
        %2105 = vst [vmem:[%s191 + $0xb98] sm:$0xff] %v1593
        %2106 = vst [vmem:[%s191 + $0xba0] sm:$0xff] %v1594
        %2107 = vst [vmem:[%s191 + $0xba8] sm:$0xff] %v1595
        %2108 = vst [vmem:[%s191 + $0xbb0] sm:$0xff] %v1596
        %2109 = vst [vmem:[%s191 + $0xbb8] sm:$0xff] %v1597
        %2110 = vst [vmem:[%s191 + $0xbc0] sm:$0xff] %v1598
        %2111 = vst [vmem:[%s191 + $0xbc8] sm:$0xff] %v1599
        %2112 = vst [vmem:[%s191 + $0xbd0] sm:$0xff] %v1600
        %2113 = vst [vmem:[%s191 + $0xbd8] sm:$0xff] %v1601
        %2114 = vst [vmem:[%s191 + $0xbe0] sm:$0xff] %v1602
        %2115 = vst [vmem:[%s191 + $0xbe8] sm:$0xff] %v1603
        %2116 = vst [vmem:[%s191 + $0xbf0] sm:$0xff] %v1604
        %2117 = vst [vmem:[%s191 + $0xbf8] sm:$0xff] %v1605
        %2118 = vst [vmem:[%s191 + $0xc00] sm:$0xff] %v1606
        %2119 = vst [vmem:[%s191 + $0xc08] sm:$0xff] %v1607
        %2120 = vst [vmem:[%s191 + $0xc10] sm:$0xff] %v1608
        %2121 = vst [vmem:[%s191 + $0xc18] sm:$0xff] %v1609
        %2122 = vst [vmem:[%s191 + $0xc20] sm:$0xff] %v1610
        %2123 = vst [vmem:[%s191 + $0xc28] sm:$0xff] %v1611
        %2124 = vst [vmem:[%s191 + $0xc30] sm:$0xff] %v1612
        %2125 = vst [vmem:[%s191 + $0xc38] sm:$0xff] %v1613
        %2126 = vst [vmem:[%s191 + $0xc40] sm:$0xff] %v1614
        %2127 = vst [vmem:[%s191 + $0xc48] sm:$0xff] %v1615
        %2128 = vst [vmem:[%s191 + $0xc50] sm:$0xff] %v1616
        %2129 = vst [vmem:[%s191 + $0xc58] sm:$0xff] %v1617
        %2130 = vst [vmem:[%s191 + $0xc60] sm:$0xff] %v1618
        %2131 = vst [vmem:[%s191 + $0xc68] sm:$0xff] %v1619
        %2132 = vst [vmem:[%s191 + $0xc70] sm:$0xff] %v1620
        %2133 = vst [vmem:[%s191 + $0xc78] sm:$0xff] %v1621
        %2134 = vst [vmem:[%s191 + $0xc80] sm:$0xff] %v1622
        %2135 = vst [vmem:[%s191 + $0xc88] sm:$0xff] %v1623
        %2136 = vst [vmem:[%s191 + $0xc90] sm:$0xff] %v1624
        %2137 = vst [vmem:[%s191 + $0xc98] sm:$0xff] %v1625
        %2138 = vst [vmem:[%s191 + $0xca0] sm:$0xff] %v1626
        %2139 = vst [vmem:[%s191 + $0xca8] sm:$0xff] %v1627
        %2140 = vst [vmem:[%s191 + $0xcb0] sm:$0xff] %v1628
        %2141 = vst [vmem:[%s191 + $0xcb8] sm:$0xff] %v1629
        %2142 = vst [vmem:[%s191 + $0xcc0] sm:$0xff] %v1630
        %2143 = vst [vmem:[%s191 + $0xcc8] sm:$0xff] %v1631
        %2144 = vst [vmem:[%s191 + $0xcd0] sm:$0xff] %v1632
        %2145 = vst [vmem:[%s191 + $0xcd8] sm:$0xff] %v1633
        %2146 = vst [vmem:[%s191 + $0xce0] sm:$0xff] %v1634
        %2147 = vst [vmem:[%s191 + $0xce8] sm:$0xff] %v1635
        %2148 = vst [vmem:[%s191 + $0xcf0] sm:$0xff] %v1636
        %2149 = vst [vmem:[%s191 + $0xcf8] sm:$0xff] %v1637
        %2150 = vst [vmem:[%s191 + $0xd00] sm:$0xff] %v1638
        %2151 = vst [vmem:[%s191 + $0xd08] sm:$0xff] %v1639
        %2152 = vst [vmem:[%s191 + $0xd10] sm:$0xff] %v1640
        %2153 = vst [vmem:[%s191 + $0xd18] sm:$0xff] %v1641
        %2154 = vst [vmem:[%s191 + $0xd20] sm:$0xff] %v1642
        %2155 = vst [vmem:[%s191 + $0xd28] sm:$0xff] %v1643
        %2156 = vst [vmem:[%s191 + $0xd30] sm:$0xff] %v1644
        %2157 = vst [vmem:[%s191 + $0xd38] sm:$0xff] %v1645
        %2158 = vst [vmem:[%s191 + $0xd40] sm:$0xff] %v1646
        %2159 = vst [vmem:[%s191 + $0xd48] sm:$0xff] %v1647
        %2160 = vst [vmem:[%s191 + $0xd50] sm:$0xff] %v1648
        %2161 = vst [vmem:[%s191 + $0xd58] sm:$0xff] %v1649
        %2162 = vst [vmem:[%s191 + $0xd60] sm:$0xff] %v1650
        %2163 = vst [vmem:[%s191 + $0xd68] sm:$0xff] %v1651
        %2164 = vst [vmem:[%s191 + $0xd70] sm:$0xff] %v1652
        %2165 = vst [vmem:[%s191 + $0xd78] sm:$0xff] %v1653
        %2166 = vst [vmem:[%s191 + $0xd80] sm:$0xff] %v1654
        %2167 = vst [vmem:[%s191 + $0xd88] sm:$0xff] %v1655
        %2168 = vst [vmem:[%s191 + $0xd90] sm:$0xff] %v1656
        %2169 = vst [vmem:[%s191 + $0xd98] sm:$0xff] %v1657
        %2170 = vst [vmem:[%s191 + $0xda0] sm:$0xff] %v1658
        %2171 = vst [vmem:[%s191 + $0xda8] sm:$0xff] %v1659
        %2172 = vst [vmem:[%s191 + $0xdb0] sm:$0xff] %v1660
        %2173 = vst [vmem:[%s191 + $0xdb8] sm:$0xff] %v1661
        %2174 = vst [vmem:[%s191 + $0xdc0] sm:$0xff] %v1662
        %2175 = vst [vmem:[%s191 + $0xdc8] sm:$0xff] %v1663
        %2176 = vst [vmem:[%s191 + $0xdd0] sm:$0xff] %v1664
        %2177 = vst [vmem:[%s191 + $0xdd8] sm:$0xff] %v1665
        %2178 = vst [vmem:[%s191 + $0xde0] sm:$0xff] %v1666
        %2179 = vst [vmem:[%s191 + $0xde8] sm:$0xff] %v1667
        %2180 = vst [vmem:[%s191 + $0xdf0] sm:$0xff] %v1668
        %2181 = vst [vmem:[%s191 + $0xdf8] sm:$0xff] %v1669
        %2182 = vst [vmem:[%s191 + $0xe00] sm:$0xff] %v1670
        %2183 = vst [vmem:[%s191 + $0xe08] sm:$0xff] %v1671
        %2184 = vst [vmem:[%s191 + $0xe10] sm:$0xff] %v1672
        %2185 = vst [vmem:[%s191 + $0xe18] sm:$0xff] %v1673
        %2186 = vst [vmem:[%s191 + $0xe20] sm:$0xff] %v1674
        %2187 = vst [vmem:[%s191 + $0xe28] sm:$0xff] %v1675
        %2188 = vst [vmem:[%s191 + $0xe30] sm:$0xff] %v1676
        %2189 = vst [vmem:[%s191 + $0xe38] sm:$0xff] %v1677
        %2190 = vst [vmem:[%s191 + $0xe40] sm:$0xff] %v1678
        %2191 = vst [vmem:[%s191 + $0xe48] sm:$0xff] %v1679
        %2192 = vst [vmem:[%s191 + $0xe50] sm:$0xff] %v1680
        %2193 = vst [vmem:[%s191 + $0xe58] sm:$0xff] %v1681
        %2194 = vst [vmem:[%s191 + $0xe60] sm:$0xff] %v1682
        %2195 = vst [vmem:[%s191 + $0xe68] sm:$0xff] %v1683
        %2196 = vst [vmem:[%s191 + $0xe70] sm:$0xff] %v1684
        %2197 = vst [vmem:[%s191 + $0xe78] sm:$0xff] %v1685
        %2198 = vst [vmem:[%s191 + $0xe80] sm:$0xff] %v1686
        %2199 = vst [vmem:[%s191 + $0xe88] sm:$0xff] %v1687
        %2200 = vst [vmem:[%s191 + $0xe90] sm:$0xff] %v1688
        %2201 = vst [vmem:[%s191 + $0xe98] sm:$0xff] %v1689
        %2202 = vst [vmem:[%s191 + $0xea0] sm:$0xff] %v1690
        %2203 = vst [vmem:[%s191 + $0xea8] sm:$0xff] %v1691
        %2204 = vst [vmem:[%s191 + $0xeb0] sm:$0xff] %v1692
        %2205 = vst [vmem:[%s191 + $0xeb8] sm:$0xff] %v1693
        %2206 = vst [vmem:[%s191 + $0xec0] sm:$0xff] %v1694
        %2207 = vst [vmem:[%s191 + $0xec8] sm:$0xff] %v1695
        %2208 = vst [vmem:[%s191 + $0xed0] sm:$0xff] %v1696
        %2209 = vst [vmem:[%s191 + $0xed8] sm:$0xff] %v1697
        %2210 = vst [vmem:[%s191 + $0xee0] sm:$0xff] %v1698
        %2211 = vst [vmem:[%s191 + $0xee8] sm:$0xff] %v1699
        %2212 = vst [vmem:[%s191 + $0xef0] sm:$0xff] %v1700
        %2213 = vst [vmem:[%s191 + $0xef8] sm:$0xff] %v1701
        %2214 = vst [vmem:[%s191 + $0xf00] sm:$0xff] %v1702
        %2215 = vst [vmem:[%s191 + $0xf08] sm:$0xff] %v1703
        %2216 = vst [vmem:[%s191 + $0xf10] sm:$0xff] %v1704
        %2217 = vst [vmem:[%s191 + $0xf18] sm:$0xff] %v1705
        %2218 = vst [vmem:[%s191 + $0xf20] sm:$0xff] %v1706
        %2219 = vst [vmem:[%s191 + $0xf28] sm:$0xff] %v1707
        %2220 = vst [vmem:[%s191 + $0xf30] sm:$0xff] %v1708
        %2221 = vst [vmem:[%s191 + $0xf38] sm:$0xff] %v1709
        %2222 = vst [vmem:[%s191 + $0xf40] sm:$0xff] %v1710
        %2223 = vst [vmem:[%s191 + $0xf48] sm:$0xff] %v1711
        %2224 = vst [vmem:[%s191 + $0xf50] sm:$0xff] %v1712
        %2225 = vst [vmem:[%s191 + $0xf58] sm:$0xff] %v1713
        %2226 = vst [vmem:[%s191 + $0xf60] sm:$0xff] %v1714
        %2227 = vst [vmem:[%s191 + $0xf68] sm:$0xff] %v1715
        %2228 = vst [vmem:[%s191 + $0xf70] sm:$0xff] %v1716
        %2229 = vst [vmem:[%s191 + $0xf78] sm:$0xff] %v1717
        %2230 = vst [vmem:[%s191 + $0xf80] sm:$0xff] %v1718
        %2231 = vst [vmem:[%s191 + $0xf88] sm:$0xff] %v1719
        %2232 = vst [vmem:[%s191 + $0xf90] sm:$0xff] %v1720
        %2233 = vst [vmem:[%s191 + $0xf98] sm:$0xff] %v1721
        %2234 = vst [vmem:[%s191 + $0xfa0] sm:$0xff] %v1722
        %2235 = vst [vmem:[%s191 + $0xfa8] sm:$0xff] %v1723
        %2236 = vst [vmem:[%s191 + $0xfb0] sm:$0xff] %v1724
        %2237 = vst [vmem:[%s191 + $0xfb8] sm:$0xff] %v1725
        %2238 = vst [vmem:[%s191 + $0xfc0] sm:$0xff] %v1726
        %2239 = vst [vmem:[%s191 + $0xfc8] sm:$0xff] %v1727
        %2240 = vst [vmem:[%s191 + $0xfd0] sm:$0xff] %v1728
        %2241 = vst [vmem:[%s191 + $0xfd8] sm:$0xff] %v1729
        %2242 = vst [vmem:[%s191 + $0xfe0] sm:$0xff] %v1730
        %2243 = vst [vmem:[%s191 + $0xfe8] sm:$0xff] %v1731
        %2244 = vst [vmem:[%s191 + $0xff0] sm:$0xff] %v1732
        %2245 = vst [vmem:[%s191 + $0xff8] sm:$0xff] %v1733
        %s2246 = sand.u32 %s98, 1
        %s2247 = scalar_lea.sflag [#allocation6], %s2246
        %s2248 = sand.u32 %s98, 1
        %s2249 = smul.addr %s2248, 4096
        %s2250 = scalar_lea.vmem [#allocation7], %s2249
        // Predicated region
        $region37: #{tpu_custom_call.1} parent=31 // pred_check
          %p2251 = pneg %p108
        $region38: #{tpu_custom_call.1} parent=31 // pred_check_branch
          %2253 = sbr.rel (%p2251) target = $region40
        $region39: #{tpu_custom_call.1} parent=31 // pred_region
          %s2254 = smul.u32 128, %s22
          %s2256 = ssub.s32 65536, 65536
          %2257 = vsyncadd %s2247, %s2256
          %s2258 = smul.addr %s2254, 4
          %s2259 = smul.addr %s2258, 128
          %s2260 = scalar_lea.hbm %s3, %s2259
          %s2261 = sshll.u32 %s2250, 4
          %s2262 = int_to_ptr.vmem [resolvable:$true] %s2261
          %2267 = dma.vmem_to_hbm [thread:$0]  %s2262, 65536, %s2260, %s2247, 512, 512, 32
        $region40: #{tpu_custom_call.1} parent=31 // pred_fallthru
          _
      $region32: #{tpu_custom_call.1} parent=5 // pred_fallthru
        _
      %p2268 = scmp.le.s32.totalorder 2, %s17
      // Predicated region
      $region41: #{tpu_custom_call.1} parent=5 // pred_check
        %p2269 = pneg %p2268
      $region42: #{tpu_custom_call.1} parent=5 // pred_check_branch
        %2271 = sbr.rel (%p2269) target = $region44
      $region43: #{tpu_custom_call.1} parent=5 // pred_region
        %s2272 = ssub.s32 %s17, 2
        // Predicated region
        $region45: #{tpu_custom_call.1} parent=43 // pred_check
          %p2273 = pneg %p114
        $region46: #{tpu_custom_call.1} parent=43 // pred_check_branch
          %2275 = sbr.rel (%p2273) target = $region48
        $region47: #{tpu_custom_call.1} parent=43 // pred_region
          %s2276 = sand.u32 %s99, 1
          %s2277 = scalar_lea.sflag [#allocation6], %s2276
          %s2278 = sand.u32 %s99, 1
          %s2279 = smul.addr %s2278, 4096
          %s2280 = scalar_lea.vmem [#allocation7], %s2279
          %2281 = dma.done %s2277, 65536
        $region48: #{tpu_custom_call.1} parent=43 // pred_fallthru
          _
      $region44: #{tpu_custom_call.1} parent=5 // pred_fallthru
        _
    $region6: #{tpu_custom_call.1} parent=1 // loop_footer
      %s21 = sadd.s32 1, %s17
    $region7: #{tpu_custom_call.1} parent=1 // loop_footer_branch
      %16 = sbr.rel target = $region3
    $region8: #{tpu_custom_call.1} parent=1 // loop_exit
      _
    %2282 = vsyncpa [#allocation5], 1
    %s2283 = scalar_lea.sflag [#allocation5], 1
    %2284 = vsyncpa %s2283, 1
    %2285 = vsyncpa [#allocation6], 1
    %s2286 = scalar_lea.sflag [#allocation6], 1
    %2287 = vsyncpa %s2286, 1

</llo_original>
